<compile_context>
chip_gen: v6e
topology: v6e:2x2x1
jax: 0.10.0
libtpu: 0.0.40
codegen_flags: <defaults>
</compile_context>

<pallas_src>
import numpy as np
import jax
import jax.numpy as jnp
from jax.experimental import pallas as pl
from jax.experimental.pallas import tpu as pltpu


OUT_PAD = 16   # lane padding of the final box slab (cols 0..8 valid, rest zero)


# ---------------------------------------------------------------------------
# Fused Pallas kernel
# ---------------------------------------------------------------------------

def _make_fused_generator_kernel(B, N, latent_dim, num_bins,
                                 dir_offset, dir_limit_offset):
    period = 2.0 * np.pi / num_bins

    def kernel(x_ref, eps_ref,
               w01_ref, xw1p_ref, wml_ref, ow1p_ref, w1_ref, w2_ref, wbr2_ref,
               bias_ref,                       # (8, 512) f32, all biases row-packed
               xw2_hbm, wbr1_hbm,              # pl.ANY (HBM) -- manually prefetched
               out_ref,
               xw2_vmem, wbr1_vmem, sem):      # scratch

        # Kick off DMA of the two largest late-stage weights; their HBM->VMEM copy
        # overlaps the early x-encoder matmuls instead of serialising before the body.
        cp_xw2 = pltpu.make_async_copy(xw2_hbm, xw2_vmem, sem.at[0])
        cp_wbr1 = pltpu.make_async_copy(wbr1_hbm, wbr1_vmem, sem.at[1])
        cp_xw2.start()
        cp_wbr1.start()

        def mm(a, w):                     # bf16 MXU matmul, f32 accumulation
            return jnp.dot(a.astype(jnp.bfloat16), w,
                           preferred_element_type=jnp.float32)

        def add_bias(v, row):             # biases live row-wise in one f32 slab
            return v + bias_ref[row:row + 1, 0:v.shape[-1]]

        def relu(v):
            return jnp.maximum(v, 0.0)

        def pool(h):                      # (B*N, F) -> (B, F): max over points
            return jnp.max(h.reshape(B, N, h.shape[-1]), axis=1)

        x = x_ref[...]                                       # (B*N, C) f32

        # ---- stage 1 of BOTH feature extractors fused: x @ [xw0 | ow0] ----
        s1 = relu(add_bias(mm(x, w01_ref[...]), 0))          # (B*N, 64s+32)

        # ---- PointNetfeat stage 2 (obj columns zeroed inside xw1p) ----
        h2 = relu(add_bias(mm(s1, xw1p_ref[...]), 1))        # (B*N, 128s)

        # ---- SimPointNetfeat stage 2; pool BEFORE bias+relu (monotone => equal) ----
        g2 = mm(s1, ow1p_ref[...])                           # (B*N, 8)
        ofeat = relu(add_bias(pool(g2), 4))                  # (B, 8)

        # ---- PointNetfeat stage 3 (prefetched weight); pool before bias+relu ----
        cp_xw2.wait()
        h3 = mm(h2, xw2_vmem[...])                           # (B*N, 512s)
        feat = relu(add_bias(pool(h3), 2))                   # (B, 512s)

        # ---- Encoder_x heads fc1|fc2 fused; reparametrize in-kernel (eval path) ----
        ml = add_bias(mm(feat, wml_ref[...]), 3)             # (B, 2*latent)
        mu = ml[:, :latent_dim]
        logvar = ml[:, latent_dim:2 * latent_dim]
        z = eps_ref[...] * jnp.exp(0.5 * logvar) + mu        # (B, latent)

        # ---- Object_feat_encoder head: cat([ofeat, z]) feeds ONE matmul ----
        hz = jnp.concatenate([ofeat, z], axis=-1)            # (B, 8 + latent)
        h1 = relu(add_bias(mm(hz, w1_ref[...]), 5))          # (B, hid)
        feat2 = relu(add_bias(mm(h1, w2_ref[...]), 6))       # (B, hid)

        # four branches (ce/s/hr/dir): one wide matmul + one block-diagonal matmul
        cp_wbr1.wait()
        hbr = relu(add_bias(mm(feat2, wbr1_vmem[...]), 7))   # (B, 4*hid)
        box = mm(hbr, wbr2_ref[...])                         # (B, 16); cols 0..8 valid

        # ---- direction post-processing (eval branch of Generator.forward) ----
        dirs = box[:, 7:7 + num_bins]                        # (B, num_bins)
        idx = jax.lax.broadcasted_iota(jnp.int32, dirs.shape, 1)
        maxv = jnp.max(dirs, axis=-1, keepdims=True)
        # first-index argmax (matches torch.max tie-breaking)
        dir_labels = jnp.min(jnp.where(dirs >= maxv, idx, num_bins),
                             axis=-1, keepdims=True).astype(jnp.float32)   # (B, 1)

        val = box[:, 6:7] - dir_offset
        # common_utils.limit_period(val, offset, period)
        dir_rot = val - jnp.floor(val / period + dir_limit_offset) * period
        heading = dir_rot + dir_offset + period * dir_labels                # (B, 1)

        lane = jax.lax.broadcasted_iota(jnp.int32, box.shape, 1)
        out_ref[...] = jnp.where(lane == 6, heading, box)

    return kernel


def generator_forward_eval(params, x, eps, cfg):
    """x: [B, N, C] float32, eps: [B, latent_dim] float32. Eval forward of Generator."""
    B, N, C = x.shape
    latent_dim = eps.shape[1]
    num_bins = cfg["NUM_DIR_BINS"]
    out_dim = 3 + 3 + 1 + num_bins

    w01, xw1p, wml, ow1p, w1, w2, wbr2 = (
        params[k] for k in ("w01", "xw1p", "wml", "ow1p", "w1", "w2", "wbr2"))
    bias_pack = params["bias"]
    xw2, wbr1 = params["xw2"], params["wbr1"]
    out_pad = wbr2.shape[1]

    kernel = _make_fused_generator_kernel(
        B, N, latent_dim, num_bins, cfg["DIR_OFFSET"], cfg["DIR_LIMIT_OFFSET"])

    # advisory cost estimate (~40 MFLOP, ~0.3 MiB accessed)
    flops = 2 * B * N * (C * w01.shape[1]
                         + w01.shape[1] * xw1p.shape[1]
                         + xw1p.shape[1] * xw2.shape[1]
                         + w01.shape[1] * ow1p.shape[1])
    flops += 2 * B * (xw2.shape[1] * wml.shape[1]
                      + w1.shape[0] * w1.shape[1]
                      + w2.shape[0] * w2.shape[1]
                      + wbr1.shape[0] * wbr1.shape[1]
                      + wbr2.shape[0] * wbr2.shape[1])
    bytes_accessed = sum(int(np.prod(a.shape)) * a.dtype.itemsize
                         for a in (x, eps, w01, xw1p, wml, ow1p, w1, w2, wbr2,
                                   bias_pack, xw2, wbr1)) + B * out_pad * 4

    vmem_spec = pl.BlockSpec(memory_space=pltpu.MemorySpace.VMEM)
    hbm_spec = pl.BlockSpec(memory_space=pl.ANY)

    out = pl.pallas_call(
        kernel,
        out_shape=jax.ShapeDtypeStruct((B, out_pad), jnp.float32),
        in_specs=[vmem_spec] * 10 + [hbm_spec, hbm_spec],
        out_specs=vmem_spec,
        scratch_shapes=[
            pltpu.VMEM(xw2.shape, xw2.dtype),     # prefetched PointNetfeat stage-3 weight
            pltpu.VMEM(wbr1.shape, wbr1.dtype),   # prefetched packed branch-1 weight
            pltpu.SemaphoreType.DMA((2,)),
        ],
        compiler_params=pltpu.CompilerParams(vmem_limit_bytes=16 * 1024 * 1024),
        cost_estimate=pl.CostEstimate(flops=int(flops),
                                      transcendentals=int(B * latent_dim),
                                      bytes_accessed=int(bytes_accessed)),
    )(x.reshape(B * N, C), eps,
      w01, xw1p, wml, ow1p, w1, w2, wbr2, bias_pack, xw2, wbr1)
    return out[:, :out_dim]


# ---------------------------------------------------------------------------
# Parameter construction (deterministic, synthetic) + packing for the kernel
# ---------------------------------------------------------------------------

def linear_params(key, fan_in, fan_out, bias=True):
    kw, kb = jax.random.split(key)
    W = jax.random.normal(kw, (fan_in, fan_out), jnp.float32) * (2.0 / fan_in) ** 0.5 * 0.3
    if bias:
        b = jax.random.normal(kb, (1, fan_out), jnp.float32) * 0.01
        return W, b
    return W, None


def bn_params(key, n):
    kg, kb = jax.random.split(key)
    gamma = 1.0 + 0.1 * jax.random.normal(kg, (n,), jnp.float32)
    beta = 0.1 * jax.random.normal(kb, (n,), jnp.float32)
    mean = jnp.zeros((n,), jnp.float32)
    var = jnp.ones((n,), jnp.float32)
    return gamma, beta, mean, var


def fold_bn(W, b, bn, eps=1e-5):
    """Fold eval-mode BatchNorm1d into the preceding linear / 1x1-conv."""
    gamma, beta, mean, var = bn
    scale = gamma / jnp.sqrt(var + eps)
    Wf = W * scale[None, :]
    bf = (b[0] - mean) * scale + beta
    return Wf, bf[None, :]


def init_params(key, input_channels, scale, latent_dim, num_bins):
    keys = iter(jax.random.split(key, 40))

    # PointNetfeat (x_encoder.fe): C -> 64*scale -> 128*scale -> 512*scale
    xdims = [input_channels, 64 * scale, 128 * scale, 512 * scale]
    x_fe = []
    for i in range(3):
        W, b = linear_params(next(keys), xdims[i], xdims[i + 1])
        x_fe.append(fold_bn(W, b, bn_params(next(keys), xdims[i + 1])))

    # Encoder_x heads fc1/fc2 : 512*scale -> latent_dim
    w_mu, b_mu = linear_params(next(keys), 512 * scale, latent_dim)
    w_lv, b_lv = linear_params(next(keys), 512 * scale, latent_dim)

    # SimPointNetfeat (obj_encoder.fe, x=0.5): C -> 32 -> 8
    sdims = [input_channels, int(64 * 0.5), int(16 * 0.5)]
    obj_fe = []
    for i in range(2):
        W, b = linear_params(next(keys), sdims[i], sdims[i + 1])
        obj_fe.append(fold_bn(W, b, bn_params(next(keys), sdims[i + 1])))
    fe_out = sdims[-1]

    # Object_feat_encoder head: fc_scale = 0.25 -> hidden = 64
    hid = int(256 * 0.25)
    in_dim = fe_out + latent_dim
    w1, b1 = linear_params(next(keys), in_dim, hid)
    w1, b1 = fold_bn(w1, b1, bn_params(next(keys), hid))
    w2, b2 = linear_params(next(keys), hid, hid)
    w2, b2 = fold_bn(w2, b2, bn_params(next(keys), hid))

    wce1, bce1 = linear_params(next(keys), hid, hid)
    ws1, bs1 = linear_params(next(keys), hid, hid)
    whr1, bhr1 = linear_params(next(keys), hid, hid)
    wdir1, bdir1 = linear_params(next(keys), hid, hid)
    wce2, _ = linear_params(next(keys), hid, 3, bias=False)
    ws2, _ = linear_params(next(keys), hid, 3, bias=False)
    whr2, _ = linear_params(next(keys), hid, 1, bias=False)
    wdir2, _ = linear_params(next(keys), hid, num_bins, bias=False)

    raw = dict(x_fe=x_fe, w_mu=w_mu, b_mu=b_mu, w_lv=w_lv, b_lv=b_lv,
               obj_fe=obj_fe, w1=w1, b1=b1, w2=w2, b2=b2,
               wce1=wce1, bce1=bce1, wce2=wce2,
               ws1=ws1, bs1=bs1, ws2=ws2,
               whr1=whr1, bhr1=bhr1, whr2=whr2,
               wdir1=wdir1, bdir1=bdir1, wdir2=wdir2)

    # ---- pack for the fused kernel ----
    n01 = xdims[1] + sdims[1]                     # fused stage-1 output width (96)

    w01 = jnp.concatenate([x_fe[0][0], obj_fe[0][0]], axis=1)     # (C, 96)
    b01 = jnp.concatenate([x_fe[0][1], obj_fe[0][1]], axis=1)     # (1, 96)
    xw1p = jnp.zeros((n01, xdims[2]), jnp.float32).at[:xdims[1], :].set(x_fe[1][0])
    ow1p = jnp.zeros((n01, sdims[2]), jnp.float32).at[xdims[1]:, :].set(obj_fe[1][0])
    xw2 = x_fe[2][0]                                              # (128s, 512s)
    wml = jnp.concatenate([w_mu, w_lv], axis=1)                   # (512s, 2*latent)
    bml = jnp.concatenate([b_mu, b_lv], axis=1)
    wbr1 = jnp.concatenate([wce1, ws1, whr1, wdir1], axis=1)      # (hid, 4*hid)
    bbr1 = jnp.concatenate([bce1, bs1, bhr1, bdir1], axis=1)

    wbr2 = jnp.zeros((4 * hid, OUT_PAD), jnp.float32)             # block-diagonal, 16 lanes
    wbr2 = wbr2.at[0 * hid:1 * hid, 0:3].set(wce2)                # centers
    wbr2 = wbr2.at[1 * hid:2 * hid, 3:6].set(ws2)                 # sizes
    wbr2 = wbr2.at[2 * hid:3 * hid, 6:7].set(whr2)                # headings
    wbr2 = wbr2.at[3 * hid:4 * hid, 7:7 + num_bins].set(wdir2)    # dirs

    # all biases row-packed into one f32 slab (single DMA); row order matches kernel
    bias_cols = 512 * scale
    bias_rows = [b01, x_fe[1][1], x_fe[2][1], bml, obj_fe[1][1], b1, b2, bbr1]
    bias_pack = jnp.zeros((8, bias_cols), jnp.float32)
    for r, brow in enumerate(bias_rows):
        bias_pack = bias_pack.at[r, :brow.shape[1]].set(brow[0])

    def bf16(a):
        return a.astype(jnp.bfloat16)

    packed = dict(w01=bf16(w01), xw1p=bf16(xw1p), wml=bf16(wml), ow1p=bf16(ow1p),
                  w1=bf16(w1), w2=bf16(w2), wbr2=bf16(wbr2),
                  bias=bias_pack,
                  xw2=bf16(xw2), wbr1=bf16(wbr1))
    return packed, raw


# ---------------------------------------------------------------------------
# Pure-JAX reference (unpacked f32 params, mirrors the PyTorch eval forward)
# ---------------------------------------------------------------------------

def reference_forward_eval(raw, x, eps, cfg):
    B, N, C = x.shape

    def pointnet(layers):
        h = x.reshape(B * N, C)
        for W, b in layers:
            h = jnp.maximum(h @ W + b, 0.0)
        return jnp.max(h.reshape(B, N, -1), axis=1)

    feat = pointnet(raw["x_fe"])
    mu = feat @ raw["w_mu"] + raw["b_mu"]
    logvar = feat @ raw["w_lv"] + raw["b_lv"]
    z = eps * jnp.exp(0.5 * logvar) + mu

    ofeat = pointnet(raw["obj_fe"])
    h = jnp.concatenate([ofeat, z], axis=1)
    h = jnp.maximum(h @ raw["w1"] + raw["b1"], 0.0)
    feat2 = jnp.maximum(h @ raw["w2"] + raw["b2"], 0.0)
    centers = jnp.maximum(feat2 @ raw["wce1"] + raw["bce1"], 0.0) @ raw["wce2"]
    sizes = jnp.maximum(feat2 @ raw["ws1"] + raw["bs1"], 0.0) @ raw["ws2"]
    headings = jnp.maximum(feat2 @ raw["whr1"] + raw["bhr1"], 0.0) @ raw["whr2"]
    dirs = jnp.maximum(feat2 @ raw["wdir1"] + raw["bdir1"], 0.0) @ raw["wdir2"]
    box = jnp.concatenate([centers, sizes, headings, dirs], axis=1)

    num_bins = cfg["NUM_DIR_BINS"]
    dir_labels = jnp.argmax(box[:, -num_bins:], axis=-1)
    period = 2.0 * np.pi / num_bins
    val = box[..., 6] - cfg["DIR_OFFSET"]
    dir_rot = val - jnp.floor(val / period + cfg["DIR_LIMIT_OFFSET"]) * period
    heading = dir_rot + cfg["DIR_OFFSET"] + period * dir_labels.astype(box.dtype)
    return box.at[..., 6].set(heading)


# ---------------------------------------------------------------------------
# Main
# ---------------------------------------------------------------------------

if __name__ == "__main__":
    cfg = dict(LATENT_DIM=3, NUM_DIR_BINS=2,
               DIR_OFFSET=0.78539, DIR_LIMIT_OFFSET=0.0)

    B, N, C_in = 2, 128, 4          # batch, num_points, point feature channels
    scale = 1

    key = jax.random.PRNGKey(0)
    k_x, k_eps, k_params = jax.random.split(key, 3)

    x = jax.random.normal(k_x, (B, N, C_in), jnp.float32)               # [B, N, C]
    eps = jax.random.normal(k_eps, (B, cfg["LATENT_DIM"]), jnp.float32)
    packed_params, raw_params = init_params(k_params, C_in, scale,
                                            cfg["LATENT_DIM"], cfg["NUM_DIR_BINS"])

    fwd = jax.jit(lambda p, xx, ee: generator_forward_eval(p, xx, ee, cfg))
    box_pred = jax.block_until_ready(fwd(packed_params, x, eps))

    with jax.default_matmul_precision("highest"):
        ref = reference_forward_eval(raw_params, x, eps, cfg)

    out_dim = 3 + 3 + 1 + cfg["NUM_DIR_BINS"]
    assert box_pred.shape == (B, out_dim)
    assert bool(jnp.all(jnp.isfinite(box_pred)))

    # kernel uses bf16 weights/activations (f32 accumulate); compare against the f32
    # reference with a tolerance that covers bf16 quantization.
    cols = jnp.array([0, 1, 2, 3, 4, 5, 7, 8])
    assert bool(jnp.allclose(box_pred[:, cols], ref[:, cols], atol=2e-2, rtol=2e-2))

    # heading (col 6) = dir_rot + offset + period * argmax(dirs); a near-tied argmax may
    # flip under bf16 quantization, shifting heading by exactly +/- period -- accept that.
    period = 2.0 * np.pi / cfg["NUM_DIR_BINS"]
    d = box_pred[:, 6] - ref[:, 6]
    k = jnp.round(d / period)
    assert bool(jnp.all(jnp.abs(k) <= 1))
    assert bool(jnp.allclose(d - k * period, 0.0, atol=2e-2))

    print("KERNEL_OK")
</pallas_src>

<mosaic_0001>
module attributes {stable_mosaic.version = 11 : i64} {
  func.func @kernel(%arg0: memref<256x4xf32, #tpu.memory_space<vmem>>, %arg1: memref<2x3xf32, #tpu.memory_space<vmem>>, %arg2: memref<4x96xbf16, #tpu.memory_space<vmem>>, %arg3: memref<96x128xbf16, #tpu.memory_space<vmem>>, %arg4: memref<512x6xbf16, #tpu.memory_space<vmem>>, %arg5: memref<96x8xbf16, #tpu.memory_space<vmem>>, %arg6: memref<11x64xbf16, #tpu.memory_space<vmem>>, %arg7: memref<64x64xbf16, #tpu.memory_space<vmem>>, %arg8: memref<256x16xbf16, #tpu.memory_space<vmem>>, %arg9: memref<8x512xf32, #tpu.memory_space<vmem>>, %arg10: memref<128x512xbf16, #tpu.memory_space<any>>, %arg11: memref<64x256xbf16, #tpu.memory_space<any>>, %arg12: memref<2x16xf32, #tpu.memory_space<vmem>>, %arg13: memref<128x512xbf16, #tpu.memory_space<vmem>>, %arg14: memref<64x256xbf16, #tpu.memory_space<vmem>>, %arg15: memref<2x!tpu.dma_semaphore, #tpu.memory_space<semaphore_mem>>) attributes {dimension_semantics = [], scalar_prefetch = 0 : i64, scratch_operands = 3 : i64, tpu.core_type = #tpu.core_type<tc>} {
    %c0_i32 = arith.constant 0 : i32
    %0 = tpu.memref_slice %arg15[%c0_i32] : memref<2x!tpu.dma_semaphore, #tpu.memory_space<semaphore_mem>> -> memref<1x!tpu.dma_semaphore, #tpu.memory_space<semaphore_mem>>
    %1 = tpu.memref_squeeze %0 : memref<1x!tpu.dma_semaphore, #tpu.memory_space<semaphore_mem>> -> memref<!tpu.dma_semaphore, #tpu.memory_space<semaphore_mem>>
    tpu.enqueue_dma source(%arg10 : memref<128x512xbf16, #tpu.memory_space<any>>) target(%arg13 : memref<128x512xbf16, #tpu.memory_space<vmem>>) target_semaphore(%1 : memref<!tpu.dma_semaphore, #tpu.memory_space<semaphore_mem>>)
    %c1_i32 = arith.constant 1 : i32
    %2 = tpu.memref_slice %arg15[%c1_i32] : memref<2x!tpu.dma_semaphore, #tpu.memory_space<semaphore_mem>> -> memref<1x!tpu.dma_semaphore, #tpu.memory_space<semaphore_mem>>
    %3 = tpu.memref_squeeze %2 : memref<1x!tpu.dma_semaphore, #tpu.memory_space<semaphore_mem>> -> memref<!tpu.dma_semaphore, #tpu.memory_space<semaphore_mem>>
    tpu.enqueue_dma source(%arg11 : memref<64x256xbf16, #tpu.memory_space<any>>) target(%arg14 : memref<64x256xbf16, #tpu.memory_space<vmem>>) target_semaphore(%3 : memref<!tpu.dma_semaphore, #tpu.memory_space<semaphore_mem>>)
    %c0 = arith.constant 0 : index
    %c0_0 = arith.constant 0 : index
    %4 = vector.load %arg0[%c0, %c0_0] : memref<256x4xf32, #tpu.memory_space<vmem>>, vector<256x4xf32>
    %c0_1 = arith.constant 0 : index
    %c0_2 = arith.constant 0 : index
    %5 = vector.load %arg2[%c0_1, %c0_2] : memref<4x96xbf16, #tpu.memory_space<vmem>>, vector<4x96xbf16>
    %6 = arith.truncf %4 : vector<256x4xf32> to vector<256x4xbf16>
    %cst = arith.constant dense<0.000000e+00> : vector<256x96xf32>
    %7 = tpu.matmul %6, %5, %cst {dimension_numbers = #tpu.dot_dimension_numbers<[1], [0], [0], [1], [0, 0, 1, 1], [], []>} : vector<256x4xbf16>, vector<4x96xbf16>, vector<256x96xf32> -> vector<256x96xf32>
    %c0_3 = arith.constant 0 : index
    %c0_4 = arith.constant 0 : index
    %8 = vector.load %arg9[%c0_3, %c0_4] : memref<8x512xf32, #tpu.memory_space<vmem>>, vector<1x96xf32>
    %9 = vector.broadcast %8 : vector<1x96xf32> to vector<256x96xf32>
    %10 = arith.addf %7, %9 : vector<256x96xf32>
    %cst_5 = arith.constant 0.000000e+00 : f32
    %11 = vector.broadcast %cst_5 : f32 to vector<256x96xf32>
    %12 = arith.maximumf %10, %11 : vector<256x96xf32>
    %c0_6 = arith.constant 0 : index
    %c0_7 = arith.constant 0 : index
    %13 = vector.load %arg3[%c0_6, %c0_7] : memref<96x128xbf16, #tpu.memory_space<vmem>>, vector<96x128xbf16>
    %14 = arith.truncf %12 : vector<256x96xf32> to vector<256x96xbf16>
    %cst_8 = arith.constant dense<0.000000e+00> : vector<256x128xf32>
    %15 = tpu.matmul %14, %13, %cst_8 {dimension_numbers = #tpu.dot_dimension_numbers<[1], [0], [0], [1], [0, 0, 1, 1], [], []>} : vector<256x96xbf16>, vector<96x128xbf16>, vector<256x128xf32> -> vector<256x128xf32>
    %c1 = arith.constant 1 : index
    %c0_9 = arith.constant 0 : index
    %16 = vector.load %arg9[%c1, %c0_9] : memref<8x512xf32, #tpu.memory_space<vmem>>, vector<1x128xf32>
    %17 = vector.broadcast %16 : vector<1x128xf32> to vector<256x128xf32>
    %18 = arith.addf %15, %17 : vector<256x128xf32>
    %cst_10 = arith.constant 0.000000e+00 : f32
    %19 = vector.broadcast %cst_10 : f32 to vector<256x128xf32>
    %20 = arith.maximumf %18, %19 : vector<256x128xf32>
    %c0_11 = arith.constant 0 : index
    %c0_12 = arith.constant 0 : index
    %21 = vector.load %arg5[%c0_11, %c0_12] : memref<96x8xbf16, #tpu.memory_space<vmem>>, vector<96x8xbf16>
    %22 = arith.truncf %12 : vector<256x96xf32> to vector<256x96xbf16>
    %cst_13 = arith.constant dense<0.000000e+00> : vector<256x8xf32>
    %23 = tpu.matmul %22, %21, %cst_13 {dimension_numbers = #tpu.dot_dimension_numbers<[1], [0], [0], [1], [0, 0, 1, 1], [], []>} : vector<256x96xbf16>, vector<96x8xbf16>, vector<256x8xf32> -> vector<256x8xf32>
    %24 = vector.shape_cast %23 : vector<256x8xf32> to vector<2x128x8xf32>
    %cst_14 = arith.constant dense<0xFF800000> : vector<2x8xf32>
    %25 = vector.multi_reduction <maximumf>, %24, %cst_14 [1] : vector<2x128x8xf32> to vector<2x8xf32>
    %c4 = arith.constant 4 : index
    %c0_15 = arith.constant 0 : index
    %26 = vector.load %arg9[%c4, %c0_15] : memref<8x512xf32, #tpu.memory_space<vmem>>, vector<1x8xf32>
    %27 = vector.broadcast %26 : vector<1x8xf32> to vector<2x8xf32>
    %28 = arith.addf %25, %27 : vector<2x8xf32>
    %cst_16 = arith.constant 0.000000e+00 : f32
    %29 = vector.broadcast %cst_16 : f32 to vector<2x8xf32>
    %30 = arith.maximumf %28, %29 : vector<2x8xf32>
    %c0_i32_17 = arith.constant 0 : i32
    %31 = tpu.memref_slice %arg15[%c0_i32_17] : memref<2x!tpu.dma_semaphore, #tpu.memory_space<semaphore_mem>> -> memref<1x!tpu.dma_semaphore, #tpu.memory_space<semaphore_mem>>
    %32 = tpu.memref_squeeze %31 : memref<1x!tpu.dma_semaphore, #tpu.memory_space<semaphore_mem>> -> memref<!tpu.dma_semaphore, #tpu.memory_space<semaphore_mem>>
    tpu.wait_dma2 semaphore(%32 : memref<!tpu.dma_semaphore, #tpu.memory_space<semaphore_mem>>) src(%arg10 : memref<128x512xbf16, #tpu.memory_space<any>>) dst(%arg13 : memref<128x512xbf16, #tpu.memory_space<vmem>>)
    %c0_18 = arith.constant 0 : index
    %c0_19 = arith.constant 0 : index
    %33 = vector.load %arg13[%c0_18, %c0_19] : memref<128x512xbf16, #tpu.memory_space<vmem>>, vector<128x512xbf16>
    %34 = arith.truncf %20 : vector<256x128xf32> to vector<256x128xbf16>
    %cst_20 = arith.constant dense<0.000000e+00> : vector<256x512xf32>
    %35 = tpu.matmul %34, %33, %cst_20 {dimension_numbers = #tpu.dot_dimension_numbers<[1], [0], [0], [1], [0, 0, 1, 1], [], []>} : vector<256x128xbf16>, vector<128x512xbf16>, vector<256x512xf32> -> vector<256x512xf32>
    %36 = vector.shape_cast %35 : vector<256x512xf32> to vector<2x128x512xf32>
    %cst_21 = arith.constant dense<0xFF800000> : vector<2x512xf32>
    %37 = vector.multi_reduction <maximumf>, %36, %cst_21 [1] : vector<2x128x512xf32> to vector<2x512xf32>
    %c2 = arith.constant 2 : index
    %c0_22 = arith.constant 0 : index
    %38 = vector.load %arg9[%c2, %c0_22] : memref<8x512xf32, #tpu.memory_space<vmem>>, vector<1x512xf32>
    %39 = vector.broadcast %38 : vector<1x512xf32> to vector<2x512xf32>
    %40 = arith.addf %37, %39 : vector<2x512xf32>
    %cst_23 = arith.constant 0.000000e+00 : f32
    %41 = vector.broadcast %cst_23 : f32 to vector<2x512xf32>
    %42 = arith.maximumf %40, %41 : vector<2x512xf32>
    %c0_24 = arith.constant 0 : index
    %c0_25 = arith.constant 0 : index
    %43 = vector.load %arg4[%c0_24, %c0_25] : memref<512x6xbf16, #tpu.memory_space<vmem>>, vector<512x6xbf16>
    %44 = arith.truncf %42 : vector<2x512xf32> to vector<2x512xbf16>
    %cst_26 = arith.constant dense<0.000000e+00> : vector<2x6xf32>
    %45 = tpu.matmul %44, %43, %cst_26 {dimension_numbers = #tpu.dot_dimension_numbers<[1], [0], [0], [1], [0, 0, 1, 1], [], []>} : vector<2x512xbf16>, vector<512x6xbf16>, vector<2x6xf32> -> vector<2x6xf32>
    %c3 = arith.constant 3 : index
    %c0_27 = arith.constant 0 : index
    %46 = vector.load %arg9[%c3, %c0_27] : memref<8x512xf32, #tpu.memory_space<vmem>>, vector<1x6xf32>
    %47 = vector.broadcast %46 : vector<1x6xf32> to vector<2x6xf32>
    %48 = arith.addf %45, %47 : vector<2x6xf32>
    %49 = vector.extract_strided_slice %48 {offsets = [0, 0], sizes = [2, 3], strides = [1, 1]} : vector<2x6xf32> to vector<2x3xf32>
    %50 = vector.extract_strided_slice %48 {offsets = [0, 3], sizes = [2, 3], strides = [1, 1]} : vector<2x6xf32> to vector<2x3xf32>
    %c0_28 = arith.constant 0 : index
    %c0_29 = arith.constant 0 : index
    %51 = vector.load %arg1[%c0_28, %c0_29] : memref<2x3xf32, #tpu.memory_space<vmem>>, vector<2x3xf32>
    %cst_30 = arith.constant 5.000000e-01 : f32
    %52 = vector.broadcast %cst_30 : f32 to vector<2x3xf32>
    %53 = arith.mulf %52, %50 : vector<2x3xf32>
    %54 = math.exp %53 : vector<2x3xf32>
    %55 = arith.mulf %51, %54 : vector<2x3xf32>
    %56 = arith.addf %55, %49 : vector<2x3xf32>
    %57 = tpu.concatenate %30, %56 in 1 : vector<2x8xf32>, vector<2x3xf32> -> vector<2x11xf32>
    %c0_31 = arith.constant 0 : index
    %c0_32 = arith.constant 0 : index
    %58 = vector.load %arg6[%c0_31, %c0_32] : memref<11x64xbf16, #tpu.memory_space<vmem>>, vector<11x64xbf16>
    %59 = arith.truncf %57 : vector<2x11xf32> to vector<2x11xbf16>
    %cst_33 = arith.constant dense<0.000000e+00> : vector<2x64xf32>
    %60 = tpu.matmul %59, %58, %cst_33 {dimension_numbers = #tpu.dot_dimension_numbers<[1], [0], [0], [1], [0, 0, 1, 1], [], []>} : vector<2x11xbf16>, vector<11x64xbf16>, vector<2x64xf32> -> vector<2x64xf32>
    %c5 = arith.constant 5 : index
    %c0_34 = arith.constant 0 : index
    %61 = vector.load %arg9[%c5, %c0_34] : memref<8x512xf32, #tpu.memory_space<vmem>>, vector<1x64xf32>
    %62 = vector.broadcast %61 : vector<1x64xf32> to vector<2x64xf32>
    %63 = arith.addf %60, %62 : vector<2x64xf32>
    %cst_35 = arith.constant 0.000000e+00 : f32
    %64 = vector.broadcast %cst_35 : f32 to vector<2x64xf32>
    %65 = arith.maximumf %63, %64 : vector<2x64xf32>
    %c0_36 = arith.constant 0 : index
    %c0_37 = arith.constant 0 : index
    %66 = vector.load %arg7[%c0_36, %c0_37] : memref<64x64xbf16, #tpu.memory_space<vmem>>, vector<64x64xbf16>
    %67 = arith.truncf %65 : vector<2x64xf32> to vector<2x64xbf16>
    %cst_38 = arith.constant dense<0.000000e+00> : vector<2x64xf32>
    %68 = tpu.matmul %67, %66, %cst_38 {dimension_numbers = #tpu.dot_dimension_numbers<[1], [0], [0], [1], [0, 0, 1, 1], [], []>} : vector<2x64xbf16>, vector<64x64xbf16>, vector<2x64xf32> -> vector<2x64xf32>
    %c6 = arith.constant 6 : index
    %c0_39 = arith.constant 0 : index
    %69 = vector.load %arg9[%c6, %c0_39] : memref<8x512xf32, #tpu.memory_space<vmem>>, vector<1x64xf32>
    %70 = vector.broadcast %69 : vector<1x64xf32> to vector<2x64xf32>
    %71 = arith.addf %68, %70 : vector<2x64xf32>
    %cst_40 = arith.constant 0.000000e+00 : f32
    %72 = vector.broadcast %cst_40 : f32 to vector<2x64xf32>
    %73 = arith.maximumf %71, %72 : vector<2x64xf32>
    %c1_i32_41 = arith.constant 1 : i32
    %74 = tpu.memref_slice %arg15[%c1_i32_41] : memref<2x!tpu.dma_semaphore, #tpu.memory_space<semaphore_mem>> -> memref<1x!tpu.dma_semaphore, #tpu.memory_space<semaphore_mem>>
    %75 = tpu.memref_squeeze %74 : memref<1x!tpu.dma_semaphore, #tpu.memory_space<semaphore_mem>> -> memref<!tpu.dma_semaphore, #tpu.memory_space<semaphore_mem>>
    tpu.wait_dma2 semaphore(%75 : memref<!tpu.dma_semaphore, #tpu.memory_space<semaphore_mem>>) src(%arg11 : memref<64x256xbf16, #tpu.memory_space<any>>) dst(%arg14 : memref<64x256xbf16, #tpu.memory_space<vmem>>)
    %c0_42 = arith.constant 0 : index
    %c0_43 = arith.constant 0 : index
    %76 = vector.load %arg14[%c0_42, %c0_43] : memref<64x256xbf16, #tpu.memory_space<vmem>>, vector<64x256xbf16>
    %77 = arith.truncf %73 : vector<2x64xf32> to vector<2x64xbf16>
    %cst_44 = arith.constant dense<0.000000e+00> : vector<2x256xf32>
    %78 = tpu.matmul %77, %76, %cst_44 {dimension_numbers = #tpu.dot_dimension_numbers<[1], [0], [0], [1], [0, 0, 1, 1], [], []>} : vector<2x64xbf16>, vector<64x256xbf16>, vector<2x256xf32> -> vector<2x256xf32>
    %c7 = arith.constant 7 : index
    %c0_45 = arith.constant 0 : index
    %79 = vector.load %arg9[%c7, %c0_45] : memref<8x512xf32, #tpu.memory_space<vmem>>, vector<1x256xf32>
    %80 = vector.broadcast %79 : vector<1x256xf32> to vector<2x256xf32>
    %81 = arith.addf %78, %80 : vector<2x256xf32>
    %cst_46 = arith.constant 0.000000e+00 : f32
    %82 = vector.broadcast %cst_46 : f32 to vector<2x256xf32>
    %83 = arith.maximumf %81, %82 : vector<2x256xf32>
    %c0_47 = arith.constant 0 : index
    %c0_48 = arith.constant 0 : index
    %84 = vector.load %arg8[%c0_47, %c0_48] : memref<256x16xbf16, #tpu.memory_space<vmem>>, vector<256x16xbf16>
    %85 = arith.truncf %83 : vector<2x256xf32> to vector<2x256xbf16>
    %cst_49 = arith.constant dense<0.000000e+00> : vector<2x16xf32>
    %86 = tpu.matmul %85, %84, %cst_49 {dimension_numbers = #tpu.dot_dimension_numbers<[1], [0], [0], [1], [0, 0, 1, 1], [], []>} : vector<2x256xbf16>, vector<256x16xbf16>, vector<2x16xf32> -> vector<2x16xf32>
    %87 = vector.extract_strided_slice %86 {offsets = [0, 7], sizes = [2, 2], strides = [1, 1]} : vector<2x16xf32> to vector<2x2xf32>
    %88 = tpu.iota {dimensions = array<i32: 1>} : vector<2x2xi32>
    %cst_50 = arith.constant dense<0xFF800000> : vector<2xf32>
    %89 = vector.multi_reduction <maximumf>, %87, %cst_50 [1] : vector<2x2xf32> to vector<2xf32>
    %90 = vector.shape_cast %89 : vector<2xf32> to vector<2x1xf32>
    %91 = vector.broadcast %90 : vector<2x1xf32> to vector<2x2xf32>
    %92 = arith.cmpf oge, %87, %91 : vector<2x2xf32>
    %c2_i32 = arith.constant 2 : i32
    %93 = vector.broadcast %c2_i32 : i32 to vector<2x2xi32>
    %94 = arith.select %92, %88, %93 : vector<2x2xi1>, vector<2x2xi32>
    %cst_51 = arith.constant dense<2147483647> : vector<2xi32>
    %95 = vector.multi_reduction <minsi>, %94, %cst_51 [1] : vector<2x2xi32> to vector<2xi32>
    %96 = vector.shape_cast %95 : vector<2xi32> to vector<2x1xi32>
    %97 = arith.sitofp %96 : vector<2x1xi32> to vector<2x1xf32>
    %98 = vector.extract_strided_slice %86 {offsets = [0, 6], sizes = [2, 1], strides = [1, 1]} : vector<2x16xf32> to vector<2x1xf32>
    %cst_52 = arith.constant 7.853900e-01 : f32
    %99 = vector.broadcast %cst_52 : f32 to vector<2x1xf32>
    %100 = arith.subf %98, %99 : vector<2x1xf32>
    %cst_53 = arith.constant 3.14159274 : f32
    %101 = vector.broadcast %cst_53 : f32 to vector<2x1xf32>
    %102 = arith.divf %100, %101 : vector<2x1xf32>
    %cst_54 = arith.constant 0.000000e+00 : f32
    %103 = vector.broadcast %cst_54 : f32 to vector<2x1xf32>
    %104 = arith.addf %102, %103 : vector<2x1xf32>
    %105 = math.floor %104 : vector<2x1xf32>
    %cst_55 = arith.constant 3.14159274 : f32
    %106 = vector.broadcast %cst_55 : f32 to vector<2x1xf32>
    %107 = arith.mulf %105, %106 : vector<2x1xf32>
    %108 = arith.subf %100, %107 : vector<2x1xf32>
    %cst_56 = arith.constant 7.853900e-01 : f32
    %109 = vector.broadcast %cst_56 : f32 to vector<2x1xf32>
    %110 = arith.addf %108, %109 : vector<2x1xf32>
    %cst_57 = arith.constant 3.14159274 : f32
    %111 = vector.broadcast %cst_57 : f32 to vector<2x1xf32>
    %112 = arith.mulf %111, %97 : vector<2x1xf32>
    %113 = arith.addf %110, %112 : vector<2x1xf32>
    %114 = tpu.iota {dimensions = array<i32: 1>} : vector<2x16xi32>
    %c6_i32 = arith.constant 6 : i32
    %115 = vector.broadcast %c6_i32 : i32 to vector<2x16xi32>
    %116 = arith.cmpi eq, %114, %115 : vector<2x16xi32>
    %117 = vector.shape_cast %113 : vector<2x1xf32> to vector<2x1xf32>
    %118 = vector.broadcast %117 : vector<2x1xf32> to vector<2x16xf32>
    %119 = arith.select %116, %118, %86 : vector<2x16xi1>, vector<2x16xf32>
    %c0_58 = arith.constant 0 : index
    %c0_59 = arith.constant 0 : index
    %120 = vector.load %arg12[%c0_58, %c0_59] : memref<2x16xf32, #tpu.memory_space<vmem>>, vector<2x16xf32>
    tpu.vector_store %arg12[%c0_58, %c0_59], %119 {strides = array<i32>} : memref<2x16xf32, #tpu.memory_space<vmem>>, vector<2x16xf32>,
    return
  }
}

</mosaic_0001>

<llo_original>
// kernel: _lambda_.1
$region0: #{_lambda_.1}
  #allocation0 [shape = 'u32[]', space=smem, size = 0x4, offset = 0x4, fixed_abs, tag = 'smem constant byte address 0x4 - core index']
  #allocation1 [shape = 'u32[144,128]{1,0:T(1,128)}', space=vmem, size = 0x12000, scoped, tag = 'internal scratch']
  #allocation2 [shape = 'bf16[128,512]{1,0:T(8,128)(2,1)}', space=vmem, size = 0x20000, scoped, tag = 'scratch operand']
  #allocation3 [shape = 'bf16[64,256]{1,0:T(8,128)(2,1)}', space=vmem, size = 0x8000, scoped, tag = 'scratch operand']
  #allocation4 [shape = 's32[2]{0}', space=sflag, size = 0x8, scoped, tag = 'scratch operand']
  #allocation7 [shape = 's32[]', space=sflag, size = 0x4, offset = 0, fixed_abs, tag = 'sflag constant byte address 0x0 - dummy sync flag']
  #allocation8 [shape = 's32[]', space=sflag, size = 0x4, offset = 0, fixed_abs, tag = 'sflag constant byte address 0x0 - dummy sync flag']
  %s0 = inlined_call_operand.vmem [shape: f32[256,4], index: 0, kind: input, shape index: {}]
  %s1 = inlined_call_operand.vmem [shape: f32[2,3], index: 1, kind: input, shape index: {}]
  %s2 = inlined_call_operand.vmem [shape: bf16[4,96], index: 2, kind: input, shape index: {}]
  %s3 = inlined_call_operand.vmem [shape: bf16[96,128], index: 3, kind: input, shape index: {}]
  %s4 = inlined_call_operand.vmem [shape: bf16[512,6], index: 4, kind: input, shape index: {}]
  %s5 = inlined_call_operand.vmem [shape: bf16[96,8], index: 5, kind: input, shape index: {}]
  %s6 = inlined_call_operand.vmem [shape: bf16[11,64], index: 6, kind: input, shape index: {}]
  %s7 = inlined_call_operand.vmem [shape: bf16[64,64], index: 7, kind: input, shape index: {}]
  %s8 = inlined_call_operand.vmem [shape: bf16[256,16], index: 8, kind: input, shape index: {}]
  %s9 = inlined_call_operand.vmem [shape: f32[8,512], index: 9, kind: input, shape index: {}]
  %s10 = inlined_call_operand.vmem [shape: bf16[128,512], index: 10, kind: input, shape index: {}]
  %s11 = inlined_call_operand.vmem [shape: bf16[64,256], index: 11, kind: input, shape index: {}]
  %s12 = inlined_call_operand.hbm [shape: f32[2,16], index: 12, kind: output, shape index: {}]
  %s13 = sld [smem:[#allocation0]]
  $region118: #{_lambda_.1} parent=0
    _
  %s15 = ssub.s32 1, %s13
  %s16 = scalar_select 0, %s15, %s13
  $region1: #{_lambda_.1} parent=0
    #allocation5 [shape = 'u8[1024]{0}', space=vmem, size = 0x400, scoped, tag = 'output window, operand 0, single buffered']
    #allocation6 [shape = 's32[1]{0}', space=sflag, size = 0x4, scoped, tag = 'scoped memory for _lambda_.1']
    %17 = vsyncpa [#allocation6], 0
    // Predicated region
    $region2: #{_lambda_.1} parent=1 // pred_check
      _
    $region3: #{_lambda_.1} parent=1 // pred_check_branch
      %19 = sbr.rel (0) target = $region5
    $region4: #{_lambda_.1} parent=1 // pred_region
      _
    $region5: #{_lambda_.1} parent=1 // pred_fallthru
      _
    // Predicated region
    $region6: #{_lambda_.1} parent=1 // pred_check
      _
    $region7: #{_lambda_.1} parent=1 // pred_check_branch
      %21 = sbr.rel (0) target = $region9
    $region8: #{_lambda_.1} parent=1 // pred_region
      _
    $region9: #{_lambda_.1} parent=1 // pred_fallthru
      _
    // Predicated region
    $region10: #{_lambda_.1} parent=1 // pred_check
      _
    $region11: #{_lambda_.1} parent=1 // pred_check_branch
      %23 = sbr.rel (0) target = $region13
    $region12: #{_lambda_.1} parent=1 // pred_region
      _
    $region13: #{_lambda_.1} parent=1 // pred_fallthru
      _
    // Predicated region
    $region14: #{_lambda_.1} parent=1 // pred_check
      _
    $region15: #{_lambda_.1} parent=1 // pred_check_branch
      %25 = sbr.rel (0) target = $region17
    $region16: #{_lambda_.1} parent=1 // pred_region
      _
    $region17: #{_lambda_.1} parent=1 // pred_fallthru
      _
    // Predicated region
    $region18: #{_lambda_.1} parent=1 // pred_check
      _
    $region19: #{_lambda_.1} parent=1 // pred_check_branch
      %27 = sbr.rel (0) target = $region21
    $region20: #{_lambda_.1} parent=1 // pred_region
      _
    $region21: #{_lambda_.1} parent=1 // pred_fallthru
      _
    // Predicated region
    $region22: #{_lambda_.1} parent=1 // pred_check
      _
    $region23: #{_lambda_.1} parent=1 // pred_check_branch
      %29 = sbr.rel (0) target = $region25
    $region24: #{_lambda_.1} parent=1 // pred_region
      _
    $region25: #{_lambda_.1} parent=1 // pred_fallthru
      _
    // Predicated region
    $region26: #{_lambda_.1} parent=1 // pred_check
      _
    $region27: #{_lambda_.1} parent=1 // pred_check_branch
      %31 = sbr.rel (0) target = $region29
    $region28: #{_lambda_.1} parent=1 // pred_region
      _
    $region29: #{_lambda_.1} parent=1 // pred_fallthru
      _
    // Predicated region
    $region30: #{_lambda_.1} parent=1 // pred_check
      _
    $region31: #{_lambda_.1} parent=1 // pred_check_branch
      %33 = sbr.rel (0) target = $region33
    $region32: #{_lambda_.1} parent=1 // pred_region
      _
    $region33: #{_lambda_.1} parent=1 // pred_fallthru
      _
    // Predicated region
    $region34: #{_lambda_.1} parent=1 // pred_check
      _
    $region35: #{_lambda_.1} parent=1 // pred_check_branch
      %35 = sbr.rel (0) target = $region37
    $region36: #{_lambda_.1} parent=1 // pred_region
      _
    $region37: #{_lambda_.1} parent=1 // pred_fallthru
      _
    // Predicated region
    $region38: #{_lambda_.1} parent=1 // pred_check
      _
    $region39: #{_lambda_.1} parent=1 // pred_check_branch
      %37 = sbr.rel (0) target = $region41
    $region40: #{_lambda_.1} parent=1 // pred_region
      _
    $region41: #{_lambda_.1} parent=1 // pred_fallthru
      _
    %p40 = scmp.lt.u32.totalorder 256, 8
    %p41 = pneg %p40
    // Predicated region
    $region42: #{_lambda_.1} parent=1 // pred_check
      _
    $region43: #{_lambda_.1} parent=1 // pred_check_branch
      %43 = sbr.rel (%p40) target = $region45
    $region44: #{_lambda_.1} parent=1 // pred_region
      %s59 = sand.u32 256, 7
      %p60 = scmp.eq.s32.totalorder %s59, 0
      // Predicated region
      $region57: #{_lambda_.1} parent=44 // pred_check
        %p61 = pneg %p60
      $region58: #{_lambda_.1} parent=44 // pred_check_branch
        %63 = sbr.rel (%p61) target = $region60
      $region59: #{_lambda_.1} parent=44 // pred_region
        loop: start=0, step=1, limit=1
        $region61: #{_lambda_.1} parent=59 // loop_pre_header
          _
        $region62: #{_lambda_.1} parent=59 // loop_header
          %s65 = sphi 0, %s69
          %p66 = scmp.ge.s32.totalorder %s65, 1
          %s70 = sphi %s10, %s10
          %s71 = sphi [#allocation2], [#allocation2]
        $region63: #{_lambda_.1} parent=59 // loop_header_branch
          %68 = sbr.rel (%p66) target = $region67
        $region64: #{_lambda_.1} parent=59 // loop_body
          %v72 = vld [vmem:[%s70] sm:$0xff]
          %73 = vst [vmem:[%s71] sm:$0xff] %v72
          %v74 = vld [vmem:[%s70 + $0x8] sm:$0xff]
          %75 = vst [vmem:[%s71 + $0x8] sm:$0xff] %v74
          %v76 = vld [vmem:[%s70 + $0x10] sm:$0xff]
          %77 = vst [vmem:[%s71 + $0x10] sm:$0xff] %v76
          %v78 = vld [vmem:[%s70 + $0x18] sm:$0xff]
          %79 = vst [vmem:[%s71 + $0x18] sm:$0xff] %v78
          %v80 = vld [vmem:[%s70 + $0x20] sm:$0xff]
          %81 = vst [vmem:[%s71 + $0x20] sm:$0xff] %v80
          %v82 = vld [vmem:[%s70 + $0x28] sm:$0xff]
          %83 = vst [vmem:[%s71 + $0x28] sm:$0xff] %v82
          %v84 = vld [vmem:[%s70 + $0x30] sm:$0xff]
          %85 = vst [vmem:[%s71 + $0x30] sm:$0xff] %v84
          %v86 = vld [vmem:[%s70 + $0x38] sm:$0xff]
          %87 = vst [vmem:[%s71 + $0x38] sm:$0xff] %v86
          %v88 = vld [vmem:[%s70 + $0x40] sm:$0xff]
          %89 = vst [vmem:[%s71 + $0x40] sm:$0xff] %v88
          %v90 = vld [vmem:[%s70 + $0x48] sm:$0xff]
          %91 = vst [vmem:[%s71 + $0x48] sm:$0xff] %v90
          %v92 = vld [vmem:[%s70 + $0x50] sm:$0xff]
          %93 = vst [vmem:[%s71 + $0x50] sm:$0xff] %v92
          %v94 = vld [vmem:[%s70 + $0x58] sm:$0xff]
          %95 = vst [vmem:[%s71 + $0x58] sm:$0xff] %v94
          %v96 = vld [vmem:[%s70 + $0x60] sm:$0xff]
          %97 = vst [vmem:[%s71 + $0x60] sm:$0xff] %v96
          %v98 = vld [vmem:[%s70 + $0x68] sm:$0xff]
          %99 = vst [vmem:[%s71 + $0x68] sm:$0xff] %v98
          %v100 = vld [vmem:[%s70 + $0x70] sm:$0xff]
          %101 = vst [vmem:[%s71 + $0x70] sm:$0xff] %v100
          %v102 = vld [vmem:[%s70 + $0x78] sm:$0xff]
          %103 = vst [vmem:[%s71 + $0x78] sm:$0xff] %v102
          %v104 = vld [vmem:[%s70 + $0x80] sm:$0xff]
          %105 = vst [vmem:[%s71 + $0x80] sm:$0xff] %v104
          %v106 = vld [vmem:[%s70 + $0x88] sm:$0xff]
          %107 = vst [vmem:[%s71 + $0x88] sm:$0xff] %v106
          %v108 = vld [vmem:[%s70 + $0x90] sm:$0xff]
          %109 = vst [vmem:[%s71 + $0x90] sm:$0xff] %v108
          %v110 = vld [vmem:[%s70 + $0x98] sm:$0xff]
          %111 = vst [vmem:[%s71 + $0x98] sm:$0xff] %v110
          %v112 = vld [vmem:[%s70 + $0xa0] sm:$0xff]
          %113 = vst [vmem:[%s71 + $0xa0] sm:$0xff] %v112
          %v114 = vld [vmem:[%s70 + $0xa8] sm:$0xff]
          %115 = vst [vmem:[%s71 + $0xa8] sm:$0xff] %v114
          %v116 = vld [vmem:[%s70 + $0xb0] sm:$0xff]
          %117 = vst [vmem:[%s71 + $0xb0] sm:$0xff] %v116
          %v118 = vld [vmem:[%s70 + $0xb8] sm:$0xff]
          %119 = vst [vmem:[%s71 + $0xb8] sm:$0xff] %v118
          %v120 = vld [vmem:[%s70 + $0xc0] sm:$0xff]
          %121 = vst [vmem:[%s71 + $0xc0] sm:$0xff] %v120
          %v122 = vld [vmem:[%s70 + $0xc8] sm:$0xff]
          %123 = vst [vmem:[%s71 + $0xc8] sm:$0xff] %v122
          %v124 = vld [vmem:[%s70 + $0xd0] sm:$0xff]
          %125 = vst [vmem:[%s71 + $0xd0] sm:$0xff] %v124
          %v126 = vld [vmem:[%s70 + $0xd8] sm:$0xff]
          %127 = vst [vmem:[%s71 + $0xd8] sm:$0xff] %v126
          %v128 = vld [vmem:[%s70 + $0xe0] sm:$0xff]
          %129 = vst [vmem:[%s71 + $0xe0] sm:$0xff] %v128
          %v130 = vld [vmem:[%s70 + $0xe8] sm:$0xff]
          %131 = vst [vmem:[%s71 + $0xe8] sm:$0xff] %v130
          %v132 = vld [vmem:[%s70 + $0xf0] sm:$0xff]
          %133 = vst [vmem:[%s71 + $0xf0] sm:$0xff] %v132
          %v134 = vld [vmem:[%s70 + $0xf8] sm:$0xff]
          %135 = vst [vmem:[%s71 + $0xf8] sm:$0xff] %v134
        $region65: #{_lambda_.1} parent=59 // loop_footer
          %s69 = sadd.s32 1, %s65
        $region66: #{_lambda_.1} parent=59 // loop_footer_branch
          %64 = sbr.rel target = $region62
        $region67: #{_lambda_.1} parent=59 // loop_exit
          _
      $region60: #{_lambda_.1} parent=44 // pred_fallthru
        _
      %p136 = pneg %p60
      // Predicated region
      $region68: #{_lambda_.1} parent=44 // pred_check
        _
      $region69: #{_lambda_.1} parent=44 // pred_check_branch
        %138 = sbr.rel (%p60) target = $region71
      $region70: #{_lambda_.1} parent=44 // pred_region
        %s139 = sand.u32 256, 7
      $region71: #{_lambda_.1} parent=44 // pred_fallthru
        _
    $region45: #{_lambda_.1} parent=1 // pred_fallthru
      _
    // Predicated region
    $region46: #{_lambda_.1} parent=1 // pred_check
      %p44 = pneg %p40
    $region47: #{_lambda_.1} parent=1 // pred_check_branch
      %46 = sbr.rel (%p44) target = $region49
    $region48: #{_lambda_.1} parent=1 // pred_region
      %s47 = sshll.u32 1, 256
      %s48 = ssub.s32 %s47, 1
      loop: start=0, step=1, limit=1
      $region50: #{_lambda_.1} parent=48 // loop_pre_header
        _
      $region51: #{_lambda_.1} parent=48 // loop_header
        %s50 = sphi 0, %s54
        %p51 = scmp.ge.s32.totalorder %s50, 1
        %s55 = sphi %s10, %s10
        %s56 = sphi [#allocation2], [#allocation2]
      $region52: #{_lambda_.1} parent=48 // loop_header_branch
        %53 = sbr.rel (%p51) target = $region56
      $region53: #{_lambda_.1} parent=48 // loop_body
        %v57 = vld [vmem:[%s55] sm:%s48]
        %58 = vst [vmem:[%s56] sm:%s48] %v57
      $region54: #{_lambda_.1} parent=48 // loop_footer
        %s54 = sadd.s32 1, %s50
      $region55: #{_lambda_.1} parent=48 // loop_footer_branch
        %49 = sbr.rel target = $region51
      $region56: #{_lambda_.1} parent=48 // loop_exit
        _
    $region49: #{_lambda_.1} parent=1 // pred_fallthru
      _
    // Predicated region
    $region72: #{_lambda_.1} parent=1 // pred_check
      _
    $region73: #{_lambda_.1} parent=1 // pred_check_branch
      %142 = sbr.rel (0) target = $region75
    $region74: #{_lambda_.1} parent=1 // pred_region
      %143 = vsyncadd [#allocation4], 4096
    $region75: #{_lambda_.1} parent=1 // pred_fallthru
      _
    %s144 = scalar_lea.sflag [#allocation4], 1
    %p146 = scmp.lt.u32.totalorder 64, 8
    %p147 = pneg %p146
    // Predicated region
    $region76: #{_lambda_.1} parent=1 // pred_check
      _
    $region77: #{_lambda_.1} parent=1 // pred_check_branch
      %149 = sbr.rel (%p146) target = $region79
    $region78: #{_lambda_.1} parent=1 // pred_region
      %s165 = sand.u32 64, 7
      %p166 = scmp.eq.s32.totalorder %s165, 0
      // Predicated region
      $region91: #{_lambda_.1} parent=78 // pred_check
        %p167 = pneg %p166
      $region92: #{_lambda_.1} parent=78 // pred_check_branch
        %169 = sbr.rel (%p167) target = $region94
      $region93: #{_lambda_.1} parent=78 // pred_region
        loop: start=0, step=1, limit=1
        $region95: #{_lambda_.1} parent=93 // loop_pre_header
          _
        $region96: #{_lambda_.1} parent=93 // loop_header
          %s171 = sphi 0, %s175
          %p172 = scmp.ge.s32.totalorder %s171, 1
          %s176 = sphi %s11, %s11
          %s177 = sphi [#allocation3], [#allocation3]
        $region97: #{_lambda_.1} parent=93 // loop_header_branch
          %174 = sbr.rel (%p172) target = $region101
        $region98: #{_lambda_.1} parent=93 // loop_body
          %v178 = vld [vmem:[%s176] sm:$0xff]
          %179 = vst [vmem:[%s177] sm:$0xff] %v178
          %v180 = vld [vmem:[%s176 + $0x8] sm:$0xff]
          %181 = vst [vmem:[%s177 + $0x8] sm:$0xff] %v180
          %v182 = vld [vmem:[%s176 + $0x10] sm:$0xff]
          %183 = vst [vmem:[%s177 + $0x10] sm:$0xff] %v182
          %v184 = vld [vmem:[%s176 + $0x18] sm:$0xff]
          %185 = vst [vmem:[%s177 + $0x18] sm:$0xff] %v184
          %v186 = vld [vmem:[%s176 + $0x20] sm:$0xff]
          %187 = vst [vmem:[%s177 + $0x20] sm:$0xff] %v186
          %v188 = vld [vmem:[%s176 + $0x28] sm:$0xff]
          %189 = vst [vmem:[%s177 + $0x28] sm:$0xff] %v188
          %v190 = vld [vmem:[%s176 + $0x30] sm:$0xff]
          %191 = vst [vmem:[%s177 + $0x30] sm:$0xff] %v190
          %v192 = vld [vmem:[%s176 + $0x38] sm:$0xff]
          %193 = vst [vmem:[%s177 + $0x38] sm:$0xff] %v192
        $region99: #{_lambda_.1} parent=93 // loop_footer
          %s175 = sadd.s32 1, %s171
        $region100: #{_lambda_.1} parent=93 // loop_footer_branch
          %170 = sbr.rel target = $region96
        $region101: #{_lambda_.1} parent=93 // loop_exit
          _
      $region94: #{_lambda_.1} parent=78 // pred_fallthru
        _
      %p194 = pneg %p166
      // Predicated region
      $region102: #{_lambda_.1} parent=78 // pred_check
        _
      $region103: #{_lambda_.1} parent=78 // pred_check_branch
        %196 = sbr.rel (%p166) target = $region105
      $region104: #{_lambda_.1} parent=78 // pred_region
        %s197 = sand.u32 64, 7
      $region105: #{_lambda_.1} parent=78 // pred_fallthru
        _
    $region79: #{_lambda_.1} parent=1 // pred_fallthru
      _
    // Predicated region
    $region80: #{_lambda_.1} parent=1 // pred_check
      %p150 = pneg %p146
    $region81: #{_lambda_.1} parent=1 // pred_check_branch
      %152 = sbr.rel (%p150) target = $region83
    $region82: #{_lambda_.1} parent=1 // pred_region
      %s153 = sshll.u32 1, 64
      %s154 = ssub.s32 %s153, 1
      loop: start=0, step=1, limit=1
      $region84: #{_lambda_.1} parent=82 // loop_pre_header
        _
      $region85: #{_lambda_.1} parent=82 // loop_header
        %s156 = sphi 0, %s160
        %p157 = scmp.ge.s32.totalorder %s156, 1
        %s161 = sphi %s11, %s11
        %s162 = sphi [#allocation3], [#allocation3]
      $region86: #{_lambda_.1} parent=82 // loop_header_branch
        %159 = sbr.rel (%p157) target = $region90
      $region87: #{_lambda_.1} parent=82 // loop_body
        %v163 = vld [vmem:[%s161] sm:%s154]
        %164 = vst [vmem:[%s162] sm:%s154] %v163
      $region88: #{_lambda_.1} parent=82 // loop_footer
        %s160 = sadd.s32 1, %s156
      $region89: #{_lambda_.1} parent=82 // loop_footer_branch
        %155 = sbr.rel target = $region85
      $region90: #{_lambda_.1} parent=82 // loop_exit
        _
    $region83: #{_lambda_.1} parent=1 // pred_fallthru
      _
    // Predicated region
    $region106: #{_lambda_.1} parent=1 // pred_check
      _
    $region107: #{_lambda_.1} parent=1 // pred_check_branch
      %200 = sbr.rel (0) target = $region109
    $region108: #{_lambda_.1} parent=1 // pred_region
      %201 = vsyncadd %s144, 1024
    $region109: #{_lambda_.1} parent=1 // pred_fallthru
      _
    %v202 = vld [vmem:[%s0] sm:$0xff]
    %v203 = vld [vmem:[%s0 + $0x8] sm:$0xff]
    %v204 = vld [vmem:[%s0 + $0x10] sm:$0xff]
    %v205 = vld [vmem:[%s0 + $0x18] sm:$0xff]
    %v206 = vld [vmem:[%s0 + $0x20] sm:$0xff]
    %v207 = vld [vmem:[%s0 + $0x28] sm:$0xff]
    %v208 = vld [vmem:[%s0 + $0x30] sm:$0xff]
    %v209 = vld [vmem:[%s0 + $0x38] sm:$0xff]
    %v210 = vld [vmem:[%s0 + $0x40] sm:$0xff]
    %v211 = vld [vmem:[%s0 + $0x48] sm:$0xff]
    %v212 = vld [vmem:[%s0 + $0x50] sm:$0xff]
    %v213 = vld [vmem:[%s0 + $0x58] sm:$0xff]
    %v214 = vld [vmem:[%s0 + $0x60] sm:$0xff]
    %v215 = vld [vmem:[%s0 + $0x68] sm:$0xff]
    %v216 = vld [vmem:[%s0 + $0x70] sm:$0xff]
    %v217 = vld [vmem:[%s0 + $0x78] sm:$0xff]
    %v218 = vld [vmem:[%s0 + $0x80] sm:$0xff]
    %v219 = vld [vmem:[%s0 + $0x88] sm:$0xff]
    %v220 = vld [vmem:[%s0 + $0x90] sm:$0xff]
    %v221 = vld [vmem:[%s0 + $0x98] sm:$0xff]
    %v222 = vld [vmem:[%s0 + $0xa0] sm:$0xff]
    %v223 = vld [vmem:[%s0 + $0xa8] sm:$0xff]
    %v224 = vld [vmem:[%s0 + $0xb0] sm:$0xff]
    %v225 = vld [vmem:[%s0 + $0xb8] sm:$0xff]
    %v226 = vld [vmem:[%s0 + $0xc0] sm:$0xff]
    %v227 = vld [vmem:[%s0 + $0xc8] sm:$0xff]
    %v228 = vld [vmem:[%s0 + $0xd0] sm:$0xff]
    %v229 = vld [vmem:[%s0 + $0xd8] sm:$0xff]
    %v230 = vld [vmem:[%s0 + $0xe0] sm:$0xff]
    %v231 = vld [vmem:[%s0 + $0xe8] sm:$0xff]
    %v232 = vld [vmem:[%s0 + $0xf0] sm:$0xff]
    %v233 = vld [vmem:[%s0 + $0xf8] sm:$0xff]
    %v234 = vld [vmem:[%s2] sm:$0x3]
    %v235 = vpack.c.bf16 %v203, %v202
    %v236 = vpack.c.bf16 %v205, %v204
    %v237 = vpack.c.bf16 %v207, %v206
    %v238 = vpack.c.bf16 %v209, %v208
    %v239 = vpack.c.bf16 %v211, %v210
    %v240 = vpack.c.bf16 %v213, %v212
    %v241 = vpack.c.bf16 %v215, %v214
    %v242 = vpack.c.bf16 %v217, %v216
    %v243 = vpack.c.bf16 %v219, %v218
    %v244 = vpack.c.bf16 %v221, %v220
    %v245 = vpack.c.bf16 %v223, %v222
    %v246 = vpack.c.bf16 %v225, %v224
    %v247 = vpack.c.bf16 %v227, %v226
    %v248 = vpack.c.bf16 %v229, %v228
    %v249 = vpack.c.bf16 %v231, %v230
    %v250 = vpack.c.bf16 %v233, %v232
    %v251 = vld [vmem:[%s9] ss:$0 sm:$0xff]
    %vm252 = vcmask 31744
    %v254 = vsel %vm252, %v235, 0
    %v257 = vsel %vm252, %v236, 0
    %v260 = vsel %vm252, %v237, 0
    %v263 = vsel %vm252, %v238, 0
    %v266 = vsel %vm252, %v239, 0
    %v269 = vsel %vm252, %v240, 0
    %v272 = vsel %vm252, %v241, 0
    %v275 = vsel %vm252, %v242, 0
    %v278 = vsel %vm252, %v243, 0
    %v281 = vsel %vm252, %v244, 0
    %v284 = vsel %vm252, %v245, 0
    %v287 = vsel %vm252, %v246, 0
    %v290 = vsel %vm252, %v247, 0
    %v293 = vsel %vm252, %v248, 0
    %v296 = vsel %vm252, %v249, 0
    %v299 = vsel %vm252, %v250, 0
    %vm301 = vcmask 1041408
    %v303 = vsel %vm301, %v234, 0
    %305 = vmatprep.subr.bf16.mxu0 0
    %306 = vmatpush1.bf16.msra.mxu0 0
    %307 = vmatprep.subr.bf16.mxu0 0
    %308 = vmatpush1.bf16.msra.mxu0 0
    %309 = vmatprep.subr.bf16.mxu0 0
    %310 = vmatpush1.bf16.msra.mxu0 0
    %311 = vmatprep.subr.bf16.mxu0 0
    %312 = vmatpush1.bf16.msra.mxu0 0
    %313 = vmatprep.subr.bf16.mxu0 0
    %314 = vmatpush1.bf16.msra.mxu0 0
    %315 = vmatprep.subr.bf16.mxu0 0
    %316 = vmatpush1.bf16.msra.mxu0 0
    %317 = vmatprep.subr.bf16.mxu0 0
    %318 = vmatpush1.bf16.msra.mxu0 0
    %319 = vmatprep.subr.bf16.mxu0 0
    %320 = vmatpush1.bf16.msra.mxu0 %v303
    %321 = vmatprep.subr.bf16.mxu0 0
    %322 = vmatpush2.bf16.msra.mxu0 0
    %323 = vmatprep.subr.bf16.mxu0 0
    %324 = vmatpush2.bf16.msra.mxu0 0
    %325 = vmatprep.subr.bf16.mxu0 0
    %326 = vmatpush2.bf16.msra.mxu0 0
    %327 = vmatprep.subr.bf16.mxu0 0
    %328 = vmatpush2.bf16.msra.mxu0 0
    %329 = vmatprep.subr.bf16.mxu0 0
    %330 = vmatpush2.bf16.msra.mxu0 0
    %331 = vmatprep.subr.bf16.mxu0 0
    %332 = vmatpush2.bf16.msra.mxu0 0
    %333 = vmatprep.subr.bf16.mxu0 0
    %334 = vmatpush2.bf16.msra.mxu0 0
    %335 = vmatprep.subr.bf16.mxu0 0
    %336 = vmatpush2.bf16.msra.mxu0 0
    %337 = vmatprep.mubr.bf16.mxu0 0
    %338 = vmatmul.mubr.bf16.gmra.mxu0 %v254
    %v339 = vpop.f32.mrf.mxu0
    %v340 = vadd.f32 %v251, %v339
    %v341 = vpop.f32.mrf.mxu0
    %v342 = vpop.f32.mrf.mxu0
    %v343 = vadd.f32 %v251, %v342
    %v344 = vpop.f32.mrf.mxu0
    %345 = vmatprep.mubr.bf16.mxu0 0
    %346 = vmatmul.mubr.bf16.gmra.mxu0 %v257
    %v347 = vpop.f32.mrf.mxu0
    %v348 = vadd.f32 %v251, %v347
    %v349 = vpop.f32.mrf.mxu0
    %v350 = vpop.f32.mrf.mxu0
    %v351 = vadd.f32 %v251, %v350
    %v352 = vpop.f32.mrf.mxu0
    %353 = vmatprep.mubr.bf16.mxu0 0
    %354 = vmatmul.mubr.bf16.gmra.mxu0 %v260
    %v355 = vpop.f32.mrf.mxu0
    %v356 = vadd.f32 %v251, %v355
    %v357 = vpop.f32.mrf.mxu0
    %v358 = vpop.f32.mrf.mxu0
    %v359 = vadd.f32 %v251, %v358
    %v360 = vpop.f32.mrf.mxu0
    %361 = vmatprep.mubr.bf16.mxu0 0
    %362 = vmatmul.mubr.bf16.gmra.mxu0 %v263
    %v363 = vpop.f32.mrf.mxu0
    %v364 = vadd.f32 %v251, %v363
    %v365 = vpop.f32.mrf.mxu0
    %v366 = vpop.f32.mrf.mxu0
    %v367 = vadd.f32 %v251, %v366
    %v368 = vpop.f32.mrf.mxu0
    %369 = vmatprep.mubr.bf16.mxu0 0
    %370 = vmatmul.mubr.bf16.gmra.mxu0 %v266
    %v371 = vpop.f32.mrf.mxu0
    %v372 = vadd.f32 %v251, %v371
    %v373 = vpop.f32.mrf.mxu0
    %v374 = vpop.f32.mrf.mxu0
    %v375 = vadd.f32 %v251, %v374
    %v376 = vpop.f32.mrf.mxu0
    %377 = vmatprep.mubr.bf16.mxu0 0
    %378 = vmatmul.mubr.bf16.gmra.mxu0 %v269
    %v379 = vpop.f32.mrf.mxu0
    %v380 = vadd.f32 %v251, %v379
    %v381 = vpop.f32.mrf.mxu0
    %v382 = vpop.f32.mrf.mxu0
    %v383 = vadd.f32 %v251, %v382
    %v384 = vpop.f32.mrf.mxu0
    %385 = vmatprep.mubr.bf16.mxu0 0
    %386 = vmatmul.mubr.bf16.gmra.mxu0 %v272
    %v387 = vpop.f32.mrf.mxu0
    %v388 = vadd.f32 %v251, %v387
    %v389 = vpop.f32.mrf.mxu0
    %v390 = vpop.f32.mrf.mxu0
    %v391 = vadd.f32 %v251, %v390
    %v392 = vpop.f32.mrf.mxu0
    %393 = vmatprep.mubr.bf16.mxu0 0
    %394 = vmatmul.mubr.bf16.gmra.mxu0 %v275
    %v395 = vpop.f32.mrf.mxu0
    %v396 = vadd.f32 %v251, %v395
    %v397 = vpop.f32.mrf.mxu0
    %v398 = vpop.f32.mrf.mxu0
    %v399 = vadd.f32 %v251, %v398
    %v400 = vpop.f32.mrf.mxu0
    %401 = vmatprep.mubr.bf16.mxu0 0
    %402 = vmatmul.mubr.bf16.gmra.mxu0 %v278
    %v403 = vpop.f32.mrf.mxu0
    %v404 = vadd.f32 %v251, %v403
    %v405 = vpop.f32.mrf.mxu0
    %v406 = vpop.f32.mrf.mxu0
    %v407 = vadd.f32 %v251, %v406
    %v408 = vpop.f32.mrf.mxu0
    %409 = vmatprep.mubr.bf16.mxu0 0
    %410 = vmatmul.mubr.bf16.gmra.mxu0 %v281
    %v411 = vpop.f32.mrf.mxu0
    %v412 = vadd.f32 %v251, %v411
    %v413 = vpop.f32.mrf.mxu0
    %v414 = vpop.f32.mrf.mxu0
    %v415 = vadd.f32 %v251, %v414
    %v416 = vpop.f32.mrf.mxu0
    %417 = vmatprep.mubr.bf16.mxu0 0
    %418 = vmatmul.mubr.bf16.gmra.mxu0 %v284
    %v419 = vpop.f32.mrf.mxu0
    %v420 = vadd.f32 %v251, %v419
    %v421 = vpop.f32.mrf.mxu0
    %v422 = vpop.f32.mrf.mxu0
    %v423 = vadd.f32 %v251, %v422
    %v424 = vpop.f32.mrf.mxu0
    %425 = vmatprep.mubr.bf16.mxu0 0
    %426 = vmatmul.mubr.bf16.gmra.mxu0 %v287
    %v427 = vpop.f32.mrf.mxu0
    %v428 = vadd.f32 %v251, %v427
    %v429 = vpop.f32.mrf.mxu0
    %v430 = vpop.f32.mrf.mxu0
    %v431 = vadd.f32 %v251, %v430
    %v432 = vpop.f32.mrf.mxu0
    %433 = vmatprep.mubr.bf16.mxu0 0
    %434 = vmatmul.mubr.bf16.gmra.mxu0 %v290
    %v435 = vpop.f32.mrf.mxu0
    %v436 = vadd.f32 %v251, %v435
    %v437 = vpop.f32.mrf.mxu0
    %v438 = vpop.f32.mrf.mxu0
    %v439 = vadd.f32 %v251, %v438
    %v440 = vpop.f32.mrf.mxu0
    %441 = vmatprep.mubr.bf16.mxu0 0
    %442 = vmatmul.mubr.bf16.gmra.mxu0 %v293
    %v443 = vpop.f32.mrf.mxu0
    %v444 = vadd.f32 %v251, %v443
    %v445 = vpop.f32.mrf.mxu0
    %v446 = vpop.f32.mrf.mxu0
    %v447 = vadd.f32 %v251, %v446
    %v448 = vpop.f32.mrf.mxu0
    %449 = vmatprep.mubr.bf16.mxu0 0
    %450 = vmatmul.mubr.bf16.gmra.mxu0 %v296
    %v451 = vpop.f32.mrf.mxu0
    %v452 = vadd.f32 %v251, %v451
    %v453 = vpop.f32.mrf.mxu0
    %v454 = vpop.f32.mrf.mxu0
    %v455 = vadd.f32 %v251, %v454
    %v456 = vpop.f32.mrf.mxu0
    %457 = vmatprep.mubr.bf16.mxu0 0
    %458 = vmatmul.mubr.bf16.gmra.mxu0 %v299
    %v459 = vpop.f32.mrf.mxu0
    %v460 = vadd.f32 %v251, %v459
    %v461 = vpop.f32.mrf.mxu0
    %v462 = vpop.f32.mrf.mxu0
    %v463 = vadd.f32 %v251, %v462
    %v464 = vpop.f32.mrf.mxu0
    %465 = vdwg.mxu0
    %v466 = vmax.f32 %v340, 0.0
    %v467 = vmax.f32 %v343, 0.0
    %v468 = vmax.f32 %v348, 0.0
    %v469 = vmax.f32 %v351, 0.0
    %v470 = vmax.f32 %v356, 0.0
    %v471 = vmax.f32 %v359, 0.0
    %v472 = vmax.f32 %v364, 0.0
    %v473 = vmax.f32 %v367, 0.0
    %v474 = vmax.f32 %v372, 0.0
    %v475 = vmax.f32 %v375, 0.0
    %v476 = vmax.f32 %v380, 0.0
    %v477 = vmax.f32 %v383, 0.0
    %v478 = vmax.f32 %v388, 0.0
    %v479 = vmax.f32 %v391, 0.0
    %v480 = vmax.f32 %v396, 0.0
    %v481 = vmax.f32 %v399, 0.0
    %v482 = vmax.f32 %v404, 0.0
    %v483 = vmax.f32 %v407, 0.0
    %v484 = vmax.f32 %v412, 0.0
    %v485 = vmax.f32 %v415, 0.0
    %v486 = vmax.f32 %v420, 0.0
    %v487 = vmax.f32 %v423, 0.0
    %v488 = vmax.f32 %v428, 0.0
    %v489 = vmax.f32 %v431, 0.0
    %v490 = vmax.f32 %v436, 0.0
    %v491 = vmax.f32 %v439, 0.0
    %v492 = vmax.f32 %v444, 0.0
    %v493 = vmax.f32 %v447, 0.0
    %v494 = vmax.f32 %v452, 0.0
    %v495 = vmax.f32 %v455, 0.0
    %v496 = vmax.f32 %v460, 0.0
    %v497 = vmax.f32 %v463, 0.0
    %v498 = vld [vmem:[%s3] sm:$0xf]
    %v499 = vld [vmem:[%s3 + $0x4] sm:$0xf]
    %v500 = vld [vmem:[%s3 + $0x8] sm:$0xf]
    %v501 = vld [vmem:[%s3 + $0xc] sm:$0xf]
    %v502 = vld [vmem:[%s3 + $0x10] sm:$0xf]
    %v503 = vld [vmem:[%s3 + $0x14] sm:$0xf]
    %v504 = vld [vmem:[%s3 + $0x18] sm:$0xf]
    %v505 = vld [vmem:[%s3 + $0x1c] sm:$0xf]
    %v506 = vld [vmem:[%s3 + $0x20] sm:$0xf]
    %v507 = vld [vmem:[%s3 + $0x24] sm:$0xf]
    %v508 = vld [vmem:[%s3 + $0x28] sm:$0xf]
    %v509 = vld [vmem:[%s3 + $0x2c] sm:$0xf]
    %v510 = vpack.c.bf16 %v467, %v466
    %v511 = vpack.c.bf16 %v469, %v468
    %v512 = vpack.c.bf16 %v471, %v470
    %v513 = vpack.c.bf16 %v473, %v472
    %v514 = vpack.c.bf16 %v475, %v474
    %v515 = vpack.c.bf16 %v477, %v476
    %v516 = vpack.c.bf16 %v479, %v478
    %v517 = vpack.c.bf16 %v481, %v480
    %v518 = vpack.c.bf16 %v483, %v482
    %v519 = vpack.c.bf16 %v485, %v484
    %v520 = vpack.c.bf16 %v487, %v486
    %v521 = vpack.c.bf16 %v489, %v488
    %v522 = vpack.c.bf16 %v491, %v490
    %v523 = vpack.c.bf16 %v493, %v492
    %v524 = vpack.c.bf16 %v495, %v494
    %v525 = vpack.c.bf16 %v497, %v496
    %v526 = vld [vmem:[%s9 + $0x1] ss:$0 sm:$0xff]
    %v539 = vunpack.c.l.b16 %v498
    %v540 = vunpack.c.l.b16 %v499
    %v541 = vunpack.c.l.b16 %v500
    %v542 = vunpack.c.l.b16 %v501
    %v543 = vunpack.c.l.b16 %v502
    %v544 = vunpack.c.l.b16 %v503
    %v545 = vunpack.c.l.b16 %v504
    %v546 = vunpack.c.l.b16 %v505
    %v547 = vunpack.c.l.b16 %v506
    %v548 = vunpack.c.l.b16 %v507
    %v549 = vunpack.c.l.b16 %v508
    %v550 = vunpack.c.l.b16 %v509
    %v551 = vpack.c.b16 %v540, %v539
    %v552 = vpack.c.b16 %v542, %v541
    %v553 = vpack.c.b16 %v544, %v543
    %v554 = vpack.c.b16 %v546, %v545
    %v555 = vpack.c.b16 %v548, %v547
    %v556 = vpack.c.b16 %v550, %v549
    %vm563 = vcmask 785408
    %v565 = vsel %vm563, %v510, 0
    %v568 = vsel %vm563, %v511, 0
    %v571 = vsel %vm563, %v512, 0
    %v574 = vsel %vm563, %v513, 0
    %v577 = vsel %vm563, %v514, 0
    %v580 = vsel %vm563, %v515, 0
    %v583 = vsel %vm563, %v516, 0
    %v586 = vsel %vm563, %v517, 0
    %v589 = vsel %vm563, %v518, 0
    %v592 = vsel %vm563, %v519, 0
    %v595 = vsel %vm563, %v520, 0
    %v598 = vsel %vm563, %v521, 0
    %v601 = vsel %vm563, %v522, 0
    %v604 = vsel %vm563, %v523, 0
    %v607 = vsel %vm563, %v524, 0
    %v610 = vsel %vm563, %v525, 0
    %612 = vmatprep.subr.bf16.mxu0 0
    %613 = vmatpush1.bf16.msra.mxu0 0
    %614 = vmatprep.subr.bf16.mxu0 0
    %615 = vmatpush1.bf16.msra.mxu0 0
    %616 = vmatprep.subr.bf16.mxu0 0
    %617 = vmatpush1.bf16.msra.mxu0 %v556
    %618 = vmatprep.subr.bf16.mxu0 0
    %619 = vmatpush1.bf16.msra.mxu0 %v555
    %620 = vmatprep.subr.bf16.mxu0 0
    %621 = vmatpush1.bf16.msra.mxu0 %v554
    %622 = vmatprep.subr.bf16.mxu0 0
    %623 = vmatpush1.bf16.msra.mxu0 %v553
    %624 = vmatprep.subr.bf16.mxu0 0
    %625 = vmatpush1.bf16.msra.mxu0 %v552
    %626 = vmatprep.subr.bf16.mxu0 0
    %627 = vmatpush1.bf16.msra.mxu0 %v551
    %628 = vmatprep.subr.bf16.mxu0 0
    %629 = vmatpush2.bf16.msra.mxu0 0
    %630 = vmatprep.subr.bf16.mxu0 0
    %631 = vmatpush2.bf16.msra.mxu0 0
    %632 = vmatprep.subr.bf16.mxu0 0
    %633 = vmatpush2.bf16.msra.mxu0 0
    %634 = vmatprep.subr.bf16.mxu0 0
    %635 = vmatpush2.bf16.msra.mxu0 0
    %636 = vmatprep.subr.bf16.mxu0 0
    %637 = vmatpush2.bf16.msra.mxu0 0
    %638 = vmatprep.subr.bf16.mxu0 0
    %639 = vmatpush2.bf16.msra.mxu0 0
    %640 = vmatprep.subr.bf16.mxu0 0
    %641 = vmatpush2.bf16.msra.mxu0 0
    %642 = vmatprep.subr.bf16.mxu0 0
    %643 = vmatpush2.bf16.msra.mxu0 0
    %644 = vmatprep.mubr.bf16.mxu0 0
    %645 = vmatmul.mubr.bf16.gmra.mxu0 %v565
    %v646 = vpop.f32.mrf.mxu0
    %v647 = vadd.f32 %v526, %v646
    %v648 = vpop.f32.mrf.mxu0
    %v649 = vpop.f32.mrf.mxu0
    %v650 = vadd.f32 %v526, %v649
    %v651 = vpop.f32.mrf.mxu0
    %652 = vmatprep.mubr.bf16.mxu0 0
    %653 = vmatmul.mubr.bf16.gmra.mxu0 %v568
    %v654 = vpop.f32.mrf.mxu0
    %v655 = vadd.f32 %v526, %v654
    %v656 = vpop.f32.mrf.mxu0
    %v657 = vpop.f32.mrf.mxu0
    %v658 = vadd.f32 %v526, %v657
    %v659 = vpop.f32.mrf.mxu0
    %660 = vmatprep.mubr.bf16.mxu0 0
    %661 = vmatmul.mubr.bf16.gmra.mxu0 %v571
    %v662 = vpop.f32.mrf.mxu0
    %v663 = vadd.f32 %v526, %v662
    %v664 = vpop.f32.mrf.mxu0
    %v665 = vpop.f32.mrf.mxu0
    %v666 = vadd.f32 %v526, %v665
    %v667 = vpop.f32.mrf.mxu0
    %668 = vmatprep.mubr.bf16.mxu0 0
    %669 = vmatmul.mubr.bf16.gmra.mxu0 %v574
    %v670 = vpop.f32.mrf.mxu0
    %v671 = vadd.f32 %v526, %v670
    %v672 = vpop.f32.mrf.mxu0
    %v673 = vpop.f32.mrf.mxu0
    %v674 = vadd.f32 %v526, %v673
    %v675 = vpop.f32.mrf.mxu0
    %676 = vmatprep.mubr.bf16.mxu0 0
    %677 = vmatmul.mubr.bf16.gmra.mxu0 %v577
    %v678 = vpop.f32.mrf.mxu0
    %v679 = vadd.f32 %v526, %v678
    %v680 = vpop.f32.mrf.mxu0
    %v681 = vpop.f32.mrf.mxu0
    %v682 = vadd.f32 %v526, %v681
    %v683 = vpop.f32.mrf.mxu0
    %684 = vmatprep.mubr.bf16.mxu0 0
    %685 = vmatmul.mubr.bf16.gmra.mxu0 %v580
    %v686 = vpop.f32.mrf.mxu0
    %v687 = vadd.f32 %v526, %v686
    %v688 = vpop.f32.mrf.mxu0
    %v689 = vpop.f32.mrf.mxu0
    %v690 = vadd.f32 %v526, %v689
    %v691 = vpop.f32.mrf.mxu0
    %692 = vmatprep.mubr.bf16.mxu0 0
    %693 = vmatmul.mubr.bf16.gmra.mxu0 %v583
    %v694 = vpop.f32.mrf.mxu0
    %v695 = vadd.f32 %v526, %v694
    %v696 = vpop.f32.mrf.mxu0
    %v697 = vpop.f32.mrf.mxu0
    %v698 = vadd.f32 %v526, %v697
    %v699 = vpop.f32.mrf.mxu0
    %700 = vmatprep.mubr.bf16.mxu0 0
    %701 = vmatmul.mubr.bf16.gmra.mxu0 %v586
    %v702 = vpop.f32.mrf.mxu0
    %v703 = vadd.f32 %v526, %v702
    %v704 = vpop.f32.mrf.mxu0
    %v705 = vpop.f32.mrf.mxu0
    %v706 = vadd.f32 %v526, %v705
    %v707 = vpop.f32.mrf.mxu0
    %708 = vmatprep.mubr.bf16.mxu0 0
    %709 = vmatmul.mubr.bf16.gmra.mxu0 %v589
    %v710 = vpop.f32.mrf.mxu0
    %v711 = vadd.f32 %v526, %v710
    %v712 = vpop.f32.mrf.mxu0
    %v713 = vpop.f32.mrf.mxu0
    %v714 = vadd.f32 %v526, %v713
    %v715 = vpop.f32.mrf.mxu0
    %716 = vmatprep.mubr.bf16.mxu0 0
    %717 = vmatmul.mubr.bf16.gmra.mxu0 %v592
    %v718 = vpop.f32.mrf.mxu0
    %v719 = vadd.f32 %v526, %v718
    %v720 = vpop.f32.mrf.mxu0
    %v721 = vpop.f32.mrf.mxu0
    %v722 = vadd.f32 %v526, %v721
    %v723 = vpop.f32.mrf.mxu0
    %724 = vmatprep.mubr.bf16.mxu0 0
    %725 = vmatmul.mubr.bf16.gmra.mxu0 %v595
    %v726 = vpop.f32.mrf.mxu0
    %v727 = vadd.f32 %v526, %v726
    %v728 = vpop.f32.mrf.mxu0
    %v729 = vpop.f32.mrf.mxu0
    %v730 = vadd.f32 %v526, %v729
    %v731 = vpop.f32.mrf.mxu0
    %732 = vmatprep.mubr.bf16.mxu0 0
    %733 = vmatmul.mubr.bf16.gmra.mxu0 %v598
    %v734 = vpop.f32.mrf.mxu0
    %v735 = vadd.f32 %v526, %v734
    %v736 = vpop.f32.mrf.mxu0
    %v737 = vpop.f32.mrf.mxu0
    %v738 = vadd.f32 %v526, %v737
    %v739 = vpop.f32.mrf.mxu0
    %740 = vmatprep.mubr.bf16.mxu0 0
    %741 = vmatmul.mubr.bf16.gmra.mxu0 %v601
    %v742 = vpop.f32.mrf.mxu0
    %v743 = vadd.f32 %v526, %v742
    %v744 = vpop.f32.mrf.mxu0
    %v745 = vpop.f32.mrf.mxu0
    %v746 = vadd.f32 %v526, %v745
    %v747 = vpop.f32.mrf.mxu0
    %748 = vmatprep.mubr.bf16.mxu0 0
    %749 = vmatmul.mubr.bf16.gmra.mxu0 %v604
    %v750 = vpop.f32.mrf.mxu0
    %v751 = vadd.f32 %v526, %v750
    %v752 = vpop.f32.mrf.mxu0
    %v753 = vpop.f32.mrf.mxu0
    %v754 = vadd.f32 %v526, %v753
    %v755 = vpop.f32.mrf.mxu0
    %756 = vmatprep.mubr.bf16.mxu0 0
    %757 = vmatmul.mubr.bf16.gmra.mxu0 %v607
    %v758 = vpop.f32.mrf.mxu0
    %v759 = vadd.f32 %v526, %v758
    %v760 = vpop.f32.mrf.mxu0
    %v761 = vpop.f32.mrf.mxu0
    %v762 = vadd.f32 %v526, %v761
    %v763 = vpop.f32.mrf.mxu0
    %764 = vmatprep.mubr.bf16.mxu0 0
    %765 = vmatmul.mubr.bf16.gmra.mxu0 %v610
    %v766 = vpop.f32.mrf.mxu0
    %v767 = vadd.f32 %v526, %v766
    %v768 = vpop.f32.mrf.mxu0
    %v769 = vpop.f32.mrf.mxu0
    %v770 = vadd.f32 %v526, %v769
    %v771 = vpop.f32.mrf.mxu0
    %772 = vdwg.mxu0
    %v773 = vmax.f32 %v647, 0.0
    %v774 = vmax.f32 %v650, 0.0
    %v775 = vmax.f32 %v655, 0.0
    %v776 = vmax.f32 %v658, 0.0
    %v777 = vmax.f32 %v663, 0.0
    %v778 = vmax.f32 %v666, 0.0
    %v779 = vmax.f32 %v671, 0.0
    %v780 = vmax.f32 %v674, 0.0
    %v781 = vmax.f32 %v679, 0.0
    %v782 = vmax.f32 %v682, 0.0
    %v783 = vmax.f32 %v687, 0.0
    %v784 = vmax.f32 %v690, 0.0
    %v785 = vmax.f32 %v695, 0.0
    %v786 = vmax.f32 %v698, 0.0
    %v787 = vmax.f32 %v703, 0.0
    %v788 = vmax.f32 %v706, 0.0
    %v789 = vmax.f32 %v711, 0.0
    %v790 = vmax.f32 %v714, 0.0
    %v791 = vmax.f32 %v719, 0.0
    %v792 = vmax.f32 %v722, 0.0
    %v793 = vmax.f32 %v727, 0.0
    %v794 = vmax.f32 %v730, 0.0
    %v795 = vmax.f32 %v735, 0.0
    %v796 = vmax.f32 %v738, 0.0
    %v797 = vmax.f32 %v743, 0.0
    %v798 = vmax.f32 %v746, 0.0
    %v799 = vmax.f32 %v751, 0.0
    %v800 = vmax.f32 %v754, 0.0
    %v801 = vmax.f32 %v759, 0.0
    %v802 = vmax.f32 %v762, 0.0
    %v803 = vmax.f32 %v767, 0.0
    %v804 = vmax.f32 %v770, 0.0
    %v805 = vld [vmem:[%s5] sm:$0xf]
    %v806 = vld [vmem:[%s5 + $0x4] sm:$0xf]
    %v807 = vld [vmem:[%s5 + $0x8] sm:$0xf]
    %v808 = vld [vmem:[%s5 + $0xc] sm:$0xf]
    %v809 = vld [vmem:[%s5 + $0x10] sm:$0xf]
    %v810 = vld [vmem:[%s5 + $0x14] sm:$0xf]
    %v811 = vld [vmem:[%s5 + $0x18] sm:$0xf]
    %v812 = vld [vmem:[%s5 + $0x1c] sm:$0xf]
    %v813 = vld [vmem:[%s5 + $0x20] sm:$0xf]
    %v814 = vld [vmem:[%s5 + $0x24] sm:$0xf]
    %v815 = vld [vmem:[%s5 + $0x28] sm:$0xf]
    %v816 = vld [vmem:[%s5 + $0x2c] sm:$0xf]
    %v829 = vunpack.c.l.b16 %v805
    %v830 = vunpack.c.l.b16 %v806
    %v831 = vunpack.c.l.b16 %v807
    %v832 = vunpack.c.l.b16 %v808
    %v833 = vunpack.c.l.b16 %v809
    %v834 = vunpack.c.l.b16 %v810
    %v835 = vunpack.c.l.b16 %v811
    %v836 = vunpack.c.l.b16 %v812
    %v837 = vunpack.c.l.b16 %v813
    %v838 = vunpack.c.l.b16 %v814
    %v839 = vunpack.c.l.b16 %v815
    %v840 = vunpack.c.l.b16 %v816
    %v841 = vpack.c.b16 %v830, %v829
    %v842 = vpack.c.b16 %v832, %v831
    %v843 = vpack.c.b16 %v834, %v833
    %v844 = vpack.c.b16 %v836, %v835
    %v845 = vpack.c.b16 %v838, %v837
    %v846 = vpack.c.b16 %v840, %v839
    %853 = vmatprep.subr.bf16.mxu0 0
    %854 = vmatpush1.bf16.msra.mxu0 0
    %855 = vmatprep.subr.bf16.mxu0 0
    %856 = vmatpush1.bf16.msra.mxu0 0
    %857 = vmatprep.subr.bf16.mxu0 0
    %858 = vmatpush1.bf16.msra.mxu0 %v846
    %859 = vmatprep.subr.bf16.mxu0 0
    %860 = vmatpush1.bf16.msra.mxu0 %v845
    %861 = vmatprep.subr.bf16.mxu0 0
    %862 = vmatpush1.bf16.msra.mxu0 %v844
    %863 = vmatprep.subr.bf16.mxu0 0
    %864 = vmatpush1.bf16.msra.mxu0 %v843
    %865 = vmatprep.subr.bf16.mxu0 0
    %866 = vmatpush1.bf16.msra.mxu0 %v842
    %867 = vmatprep.subr.bf16.mxu0 0
    %868 = vmatpush1.bf16.msra.mxu0 %v841
    %869 = vmatprep.subr.bf16.mxu0 0
    %870 = vmatpush2.bf16.msra.mxu0 0
    %871 = vmatprep.subr.bf16.mxu0 0
    %872 = vmatpush2.bf16.msra.mxu0 0
    %873 = vmatprep.subr.bf16.mxu0 0
    %874 = vmatpush2.bf16.msra.mxu0 0
    %875 = vmatprep.subr.bf16.mxu0 0
    %876 = vmatpush2.bf16.msra.mxu0 0
    %877 = vmatprep.subr.bf16.mxu0 0
    %878 = vmatpush2.bf16.msra.mxu0 0
    %879 = vmatprep.subr.bf16.mxu0 0
    %880 = vmatpush2.bf16.msra.mxu0 0
    %881 = vmatprep.subr.bf16.mxu0 0
    %882 = vmatpush2.bf16.msra.mxu0 0
    %883 = vmatprep.subr.bf16.mxu0 0
    %884 = vmatpush2.bf16.msra.mxu0 0
    %885 = vmatprep.mubr.bf16.mxu0 0
    %886 = vmatmul.mubr.bf16.gmra.mxu0 %v565
    %v887 = vpop.f32.mrf.mxu0
    %v888 = vadd.f32 0.0, %v887
    %v889 = vpop.f32.mrf.mxu0
    %v890 = vpop.f32.mrf.mxu0
    %v891 = vadd.f32 0.0, %v890
    %v892 = vpop.f32.mrf.mxu0
    %893 = vmatprep.mubr.bf16.mxu0 0
    %894 = vmatmul.mubr.bf16.gmra.mxu0 %v568
    %v895 = vpop.f32.mrf.mxu0
    %v896 = vadd.f32 0.0, %v895
    %v897 = vpop.f32.mrf.mxu0
    %v898 = vpop.f32.mrf.mxu0
    %v899 = vadd.f32 0.0, %v898
    %v900 = vpop.f32.mrf.mxu0
    %901 = vmatprep.mubr.bf16.mxu0 0
    %902 = vmatmul.mubr.bf16.gmra.mxu0 %v571
    %v903 = vpop.f32.mrf.mxu0
    %v904 = vadd.f32 0.0, %v903
    %v905 = vpop.f32.mrf.mxu0
    %v906 = vpop.f32.mrf.mxu0
    %v907 = vadd.f32 0.0, %v906
    %v908 = vpop.f32.mrf.mxu0
    %909 = vmatprep.mubr.bf16.mxu0 0
    %910 = vmatmul.mubr.bf16.gmra.mxu0 %v574
    %v911 = vpop.f32.mrf.mxu0
    %v912 = vadd.f32 0.0, %v911
    %v913 = vpop.f32.mrf.mxu0
    %v914 = vpop.f32.mrf.mxu0
    %v915 = vadd.f32 0.0, %v914
    %v916 = vpop.f32.mrf.mxu0
    %917 = vmatprep.mubr.bf16.mxu0 0
    %918 = vmatmul.mubr.bf16.gmra.mxu0 %v577
    %v919 = vpop.f32.mrf.mxu0
    %v920 = vadd.f32 0.0, %v919
    %v921 = vpop.f32.mrf.mxu0
    %v922 = vpop.f32.mrf.mxu0
    %v923 = vadd.f32 0.0, %v922
    %v924 = vpop.f32.mrf.mxu0
    %925 = vmatprep.mubr.bf16.mxu0 0
    %926 = vmatmul.mubr.bf16.gmra.mxu0 %v580
    %v927 = vpop.f32.mrf.mxu0
    %v928 = vadd.f32 0.0, %v927
    %v929 = vpop.f32.mrf.mxu0
    %v930 = vpop.f32.mrf.mxu0
    %v931 = vadd.f32 0.0, %v930
    %v932 = vpop.f32.mrf.mxu0
    %933 = vmatprep.mubr.bf16.mxu0 0
    %934 = vmatmul.mubr.bf16.gmra.mxu0 %v583
    %v935 = vpop.f32.mrf.mxu0
    %v936 = vadd.f32 0.0, %v935
    %v937 = vpop.f32.mrf.mxu0
    %v938 = vpop.f32.mrf.mxu0
    %v939 = vadd.f32 0.0, %v938
    %v940 = vpop.f32.mrf.mxu0
    %941 = vmatprep.mubr.bf16.mxu0 0
    %942 = vmatmul.mubr.bf16.gmra.mxu0 %v586
    %v943 = vpop.f32.mrf.mxu0
    %v944 = vadd.f32 0.0, %v943
    %v945 = vpop.f32.mrf.mxu0
    %v946 = vpop.f32.mrf.mxu0
    %v947 = vadd.f32 0.0, %v946
    %v948 = vpop.f32.mrf.mxu0
    %949 = vmatprep.mubr.bf16.mxu0 0
    %950 = vmatmul.mubr.bf16.gmra.mxu0 %v589
    %v951 = vpop.f32.mrf.mxu0
    %v952 = vadd.f32 0.0, %v951
    %v953 = vpop.f32.mrf.mxu0
    %v954 = vpop.f32.mrf.mxu0
    %v955 = vadd.f32 0.0, %v954
    %v956 = vpop.f32.mrf.mxu0
    %957 = vmatprep.mubr.bf16.mxu0 0
    %958 = vmatmul.mubr.bf16.gmra.mxu0 %v592
    %v959 = vpop.f32.mrf.mxu0
    %v960 = vadd.f32 0.0, %v959
    %v961 = vpop.f32.mrf.mxu0
    %v962 = vpop.f32.mrf.mxu0
    %v963 = vadd.f32 0.0, %v962
    %v964 = vpop.f32.mrf.mxu0
    %965 = vmatprep.mubr.bf16.mxu0 0
    %966 = vmatmul.mubr.bf16.gmra.mxu0 %v595
    %v967 = vpop.f32.mrf.mxu0
    %v968 = vadd.f32 0.0, %v967
    %v969 = vpop.f32.mrf.mxu0
    %v970 = vpop.f32.mrf.mxu0
    %v971 = vadd.f32 0.0, %v970
    %v972 = vpop.f32.mrf.mxu0
    %973 = vmatprep.mubr.bf16.mxu0 0
    %974 = vmatmul.mubr.bf16.gmra.mxu0 %v598
    %v975 = vpop.f32.mrf.mxu0
    %v976 = vadd.f32 0.0, %v975
    %v977 = vpop.f32.mrf.mxu0
    %v978 = vpop.f32.mrf.mxu0
    %v979 = vadd.f32 0.0, %v978
    %v980 = vpop.f32.mrf.mxu0
    %981 = vmatprep.mubr.bf16.mxu0 0
    %982 = vmatmul.mubr.bf16.gmra.mxu0 %v601
    %v983 = vpop.f32.mrf.mxu0
    %v984 = vadd.f32 0.0, %v983
    %v985 = vpop.f32.mrf.mxu0
    %v986 = vpop.f32.mrf.mxu0
    %v987 = vadd.f32 0.0, %v986
    %v988 = vpop.f32.mrf.mxu0
    %989 = vmatprep.mubr.bf16.mxu0 0
    %990 = vmatmul.mubr.bf16.gmra.mxu0 %v604
    %v991 = vpop.f32.mrf.mxu0
    %v992 = vadd.f32 0.0, %v991
    %v993 = vpop.f32.mrf.mxu0
    %v994 = vpop.f32.mrf.mxu0
    %v995 = vadd.f32 0.0, %v994
    %v996 = vpop.f32.mrf.mxu0
    %997 = vmatprep.mubr.bf16.mxu0 0
    %998 = vmatmul.mubr.bf16.gmra.mxu0 %v607
    %v999 = vpop.f32.mrf.mxu0
    %v1000 = vadd.f32 0.0, %v999
    %v1001 = vpop.f32.mrf.mxu0
    %v1002 = vpop.f32.mrf.mxu0
    %v1003 = vadd.f32 0.0, %v1002
    %v1004 = vpop.f32.mrf.mxu0
    %1005 = vmatprep.mubr.bf16.mxu0 0
    %1006 = vmatmul.mubr.bf16.gmra.mxu0 %v610
    %v1007 = vpop.f32.mrf.mxu0
    %v1008 = vadd.f32 0.0, %v1007
    %v1009 = vpop.f32.mrf.mxu0
    %v1010 = vpop.f32.mrf.mxu0
    %v1011 = vadd.f32 0.0, %v1010
    %v1012 = vpop.f32.mrf.mxu0
    %1013 = vdwg.mxu0
    %vm1014 = vcmask 64512
    %v1015 = vsel %vm1014, %v888, -inf
    %v1016 = vsel %vm1014, %v891, -inf
    %v1017 = vsel %vm1014, %v896, -inf
    %v1018 = vmax.f32 %v1015, %v1017
    %v1019 = vsel %vm1014, %v899, -inf
    %v1020 = vmax.f32 %v1016, %v1019
    %v1021 = vsel %vm1014, %v904, -inf
    %v1022 = vmax.f32 %v1018, %v1021
    %v1023 = vsel %vm1014, %v907, -inf
    %v1024 = vmax.f32 %v1020, %v1023
    %v1025 = vsel %vm1014, %v912, -inf
    %v1026 = vmax.f32 %v1022, %v1025
    %v1027 = vsel %vm1014, %v915, -inf
    %v1028 = vmax.f32 %v1024, %v1027
    %v1029 = vsel %vm1014, %v920, -inf
    %v1030 = vmax.f32 %v1026, %v1029
    %v1031 = vsel %vm1014, %v923, -inf
    %v1032 = vmax.f32 %v1028, %v1031
    %v1033 = vsel %vm1014, %v928, -inf
    %v1034 = vmax.f32 %v1030, %v1033
    %v1035 = vsel %vm1014, %v931, -inf
    %v1036 = vmax.f32 %v1032, %v1035
    %v1037 = vsel %vm1014, %v936, -inf
    %v1038 = vmax.f32 %v1034, %v1037
    %v1039 = vsel %vm1014, %v939, -inf
    %v1040 = vmax.f32 %v1036, %v1039
    %v1041 = vsel %vm1014, %v944, -inf
    %v1042 = vmax.f32 %v1038, %v1041
    %v1043 = vsel %vm1014, %v947, -inf
    %v1044 = vmax.f32 %v1040, %v1043
    %v1045 = vmax.f32 %v1042, %v1044
    %v1046 = vrot.slane %v1045, 4
    %v1047 = vmax.f32 %v1045, %v1046
    %v1048 = vrot.slane %v1047, 2
    %v1049 = vmax.f32 %v1047, %v1048
    %v1050 = vrot.slane %v1049, 1
    %v1051 = vmax.f32 %v1049, %v1050
    %v1052 = vsel %vm1014, %v952, -inf
    %v1053 = vsel %vm1014, %v955, -inf
    %v1054 = vsel %vm1014, %v960, -inf
    %v1055 = vmax.f32 %v1052, %v1054
    %v1056 = vsel %vm1014, %v963, -inf
    %v1057 = vmax.f32 %v1053, %v1056
    %v1058 = vsel %vm1014, %v968, -inf
    %v1059 = vmax.f32 %v1055, %v1058
    %v1060 = vsel %vm1014, %v971, -inf
    %v1061 = vmax.f32 %v1057, %v1060
    %v1062 = vsel %vm1014, %v976, -inf
    %v1063 = vmax.f32 %v1059, %v1062
    %v1064 = vsel %vm1014, %v979, -inf
    %v1065 = vmax.f32 %v1061, %v1064
    %v1066 = vsel %vm1014, %v984, -inf
    %v1067 = vmax.f32 %v1063, %v1066
    %v1068 = vsel %vm1014, %v987, -inf
    %v1069 = vmax.f32 %v1065, %v1068
    %v1070 = vsel %vm1014, %v992, -inf
    %v1071 = vmax.f32 %v1067, %v1070
    %v1072 = vsel %vm1014, %v995, -inf
    %v1073 = vmax.f32 %v1069, %v1072
    %v1074 = vsel %vm1014, %v1000, -inf
    %v1075 = vmax.f32 %v1071, %v1074
    %v1076 = vsel %vm1014, %v1003, -inf
    %v1077 = vmax.f32 %v1073, %v1076
    %v1078 = vsel %vm1014, %v1008, -inf
    %v1079 = vmax.f32 %v1075, %v1078
    %v1080 = vsel %vm1014, %v1011, -inf
    %v1081 = vmax.f32 %v1077, %v1080
    %v1082 = vmax.f32 %v1079, %v1081
    %v1083 = vrot.slane %v1082, 4
    %v1084 = vmax.f32 %v1082, %v1083
    %v1085 = vrot.slane %v1084, 2
    %v1086 = vmax.f32 %v1084, %v1085
    %v1087 = vrot.slane %v1086, 1
    %v1088 = vmax.f32 %v1086, %v1087
    %v1089 = vld [vmem:[%s9 + $0x4] ss:$0 sm:$0xff]
    %v1090 = vadd.f32 %v1051, %v1089
    %v1091 = vadd.f32 %v1088, %v1089
    %v1092 = vmax.f32 %v1090, 0.0
    %v1093 = vmax.f32 %v1091, 0.0
    %s1094 = smul.u32 4, 16
    %s1095 = smul.u32 %s1094, 4
    %s1096 = sshll.u32 %s1095, 4
    %1097 = dma.done [#allocation4], %s1096
    %v1098 = vld [vmem:[#allocation2] sm:$0xff]
    %v1099 = vld [vmem:[#allocation2 + $0x8] sm:$0xff]
    %v1100 = vld [vmem:[#allocation2 + $0x10] sm:$0xff]
    %v1101 = vld [vmem:[#allocation2 + $0x18] sm:$0xff]
    %v1102 = vld [vmem:[#allocation2 + $0x20] sm:$0xff]
    %v1103 = vld [vmem:[#allocation2 + $0x28] sm:$0xff]
    %v1104 = vld [vmem:[#allocation2 + $0x30] sm:$0xff]
    %v1105 = vld [vmem:[#allocation2 + $0x38] sm:$0xff]
    %v1106 = vld [vmem:[#allocation2 + $0x40] sm:$0xff]
    %v1107 = vld [vmem:[#allocation2 + $0x48] sm:$0xff]
    %v1108 = vld [vmem:[#allocation2 + $0x50] sm:$0xff]
    %v1109 = vld [vmem:[#allocation2 + $0x58] sm:$0xff]
    %v1110 = vld [vmem:[#allocation2 + $0x60] sm:$0xff]
    %v1111 = vld [vmem:[#allocation2 + $0x68] sm:$0xff]
    %v1112 = vld [vmem:[#allocation2 + $0x70] sm:$0xff]
    %v1113 = vld [vmem:[#allocation2 + $0x78] sm:$0xff]
    %v1114 = vld [vmem:[#allocation2 + $0x80] sm:$0xff]
    %v1115 = vld [vmem:[#allocation2 + $0x88] sm:$0xff]
    %v1116 = vld [vmem:[#allocation2 + $0x90] sm:$0xff]
    %v1117 = vld [vmem:[#allocation2 + $0x98] sm:$0xff]
    %v1118 = vld [vmem:[#allocation2 + $0xa0] sm:$0xff]
    %v1119 = vld [vmem:[#allocation2 + $0xa8] sm:$0xff]
    %v1120 = vld [vmem:[#allocation2 + $0xb0] sm:$0xff]
    %v1121 = vld [vmem:[#allocation2 + $0xb8] sm:$0xff]
    %v1122 = vld [vmem:[#allocation2 + $0xc0] sm:$0xff]
    %v1123 = vld [vmem:[#allocation2 + $0xc8] sm:$0xff]
    %v1124 = vld [vmem:[#allocation2 + $0xd0] sm:$0xff]
    %v1125 = vld [vmem:[#allocation2 + $0xd8] sm:$0xff]
    %v1126 = vld [vmem:[#allocation2 + $0xe0] sm:$0xff]
    %v1127 = vld [vmem:[#allocation2 + $0xe8] sm:$0xff]
    %v1128 = vld [vmem:[#allocation2 + $0xf0] sm:$0xff]
    %v1129 = vld [vmem:[#allocation2 + $0xf8] sm:$0xff]
    %v1130 = vpack.c.bf16 %v774, %v773
    %v1131 = vpack.c.bf16 %v776, %v775
    %v1132 = vpack.c.bf16 %v778, %v777
    %v1133 = vpack.c.bf16 %v780, %v779
    %v1134 = vpack.c.bf16 %v782, %v781
    %v1135 = vpack.c.bf16 %v784, %v783
    %v1136 = vpack.c.bf16 %v786, %v785
    %v1137 = vpack.c.bf16 %v788, %v787
    %v1138 = vpack.c.bf16 %v790, %v789
    %v1139 = vpack.c.bf16 %v792, %v791
    %v1140 = vpack.c.bf16 %v794, %v793
    %v1141 = vpack.c.bf16 %v796, %v795
    %v1142 = vpack.c.bf16 %v798, %v797
    %v1143 = vpack.c.bf16 %v800, %v799
    %v1144 = vpack.c.bf16 %v802, %v801
    %v1145 = vpack.c.bf16 %v804, %v803
    %v1178 = vunpack.c.l.b16 %v1098
    %v1179 = vunpack.c.h.b16 %v1098
    %v1180 = vunpack.c.l.b16 %v1099
    %v1181 = vunpack.c.h.b16 %v1099
    %v1182 = vunpack.c.l.b16 %v1100
    %v1183 = vunpack.c.h.b16 %v1100
    %v1184 = vunpack.c.l.b16 %v1101
    %v1185 = vunpack.c.h.b16 %v1101
    %v1186 = vunpack.c.l.b16 %v1102
    %v1187 = vunpack.c.h.b16 %v1102
    %v1188 = vunpack.c.l.b16 %v1103
    %v1189 = vunpack.c.h.b16 %v1103
    %v1190 = vunpack.c.l.b16 %v1104
    %v1191 = vunpack.c.h.b16 %v1104
    %v1192 = vunpack.c.l.b16 %v1105
    %v1193 = vunpack.c.h.b16 %v1105
    %v1194 = vunpack.c.l.b16 %v1106
    %v1195 = vunpack.c.h.b16 %v1106
    %v1196 = vunpack.c.l.b16 %v1107
    %v1197 = vunpack.c.h.b16 %v1107
    %v1198 = vunpack.c.l.b16 %v1108
    %v1199 = vunpack.c.h.b16 %v1108
    %v1200 = vunpack.c.l.b16 %v1109
    %v1201 = vunpack.c.h.b16 %v1109
    %v1202 = vunpack.c.l.b16 %v1110
    %v1203 = vunpack.c.h.b16 %v1110
    %v1204 = vunpack.c.l.b16 %v1111
    %v1205 = vunpack.c.h.b16 %v1111
    %v1206 = vunpack.c.l.b16 %v1112
    %v1207 = vunpack.c.h.b16 %v1112
    %v1208 = vunpack.c.l.b16 %v1113
    %v1209 = vunpack.c.h.b16 %v1113
    %v1210 = vunpack.c.l.b16 %v1114
    %v1211 = vunpack.c.h.b16 %v1114
    %v1212 = vunpack.c.l.b16 %v1115
    %v1213 = vunpack.c.h.b16 %v1115
    %v1214 = vunpack.c.l.b16 %v1116
    %v1215 = vunpack.c.h.b16 %v1116
    %v1216 = vunpack.c.l.b16 %v1117
    %v1217 = vunpack.c.h.b16 %v1117
    %v1218 = vunpack.c.l.b16 %v1118
    %v1219 = vunpack.c.h.b16 %v1118
    %v1220 = vunpack.c.l.b16 %v1119
    %v1221 = vunpack.c.h.b16 %v1119
    %v1222 = vunpack.c.l.b16 %v1120
    %v1223 = vunpack.c.h.b16 %v1120
    %v1224 = vunpack.c.l.b16 %v1121
    %v1225 = vunpack.c.h.b16 %v1121
    %v1226 = vunpack.c.l.b16 %v1122
    %v1227 = vunpack.c.h.b16 %v1122
    %v1228 = vunpack.c.l.b16 %v1123
    %v1229 = vunpack.c.h.b16 %v1123
    %v1230 = vunpack.c.l.b16 %v1124
    %v1231 = vunpack.c.h.b16 %v1124
    %v1232 = vunpack.c.l.b16 %v1125
    %v1233 = vunpack.c.h.b16 %v1125
    %v1234 = vunpack.c.l.b16 %v1126
    %v1235 = vunpack.c.h.b16 %v1126
    %v1236 = vunpack.c.l.b16 %v1127
    %v1237 = vunpack.c.h.b16 %v1127
    %v1238 = vunpack.c.l.b16 %v1128
    %v1239 = vunpack.c.h.b16 %v1128
    %v1240 = vunpack.c.l.b16 %v1129
    %v1241 = vunpack.c.h.b16 %v1129
    %v1242 = vpack.c.b16 %v1182, %v1178
    %v1243 = vpack.c.b16 %v1183, %v1179
    %v1244 = vpack.c.b16 %v1184, %v1180
    %v1245 = vpack.c.b16 %v1185, %v1181
    %v1246 = vpack.c.b16 %v1190, %v1186
    %v1247 = vpack.c.b16 %v1191, %v1187
    %v1248 = vpack.c.b16 %v1192, %v1188
    %v1249 = vpack.c.b16 %v1193, %v1189
    %v1250 = vpack.c.b16 %v1198, %v1194
    %v1251 = vpack.c.b16 %v1199, %v1195
    %v1252 = vpack.c.b16 %v1200, %v1196
    %v1253 = vpack.c.b16 %v1201, %v1197
    %v1254 = vpack.c.b16 %v1206, %v1202
    %v1255 = vpack.c.b16 %v1207, %v1203
    %v1256 = vpack.c.b16 %v1208, %v1204
    %v1257 = vpack.c.b16 %v1209, %v1205
    %v1258 = vpack.c.b16 %v1214, %v1210
    %v1259 = vpack.c.b16 %v1215, %v1211
    %v1260 = vpack.c.b16 %v1216, %v1212
    %v1261 = vpack.c.b16 %v1217, %v1213
    %v1262 = vpack.c.b16 %v1222, %v1218
    %v1263 = vpack.c.b16 %v1223, %v1219
    %v1264 = vpack.c.b16 %v1224, %v1220
    %v1265 = vpack.c.b16 %v1225, %v1221
    %v1266 = vpack.c.b16 %v1230, %v1226
    %v1267 = vpack.c.b16 %v1231, %v1227
    %v1268 = vpack.c.b16 %v1232, %v1228
    %v1269 = vpack.c.b16 %v1233, %v1229
    %v1270 = vpack.c.b16 %v1238, %v1234
    %v1271 = vpack.c.b16 %v1239, %v1235
    %v1272 = vpack.c.b16 %v1240, %v1236
    %v1273 = vpack.c.b16 %v1241, %v1237
    %1306 = vmatprep.subr.bf16.mxu0 %v1271
    %1307 = vmatpush1.bf16.msra.mxu0 %v1270
    %1308 = vmatprep.subr.bf16.mxu0 %v1267
    %1309 = vmatpush1.bf16.msra.mxu0 %v1266
    %1310 = vmatprep.subr.bf16.mxu0 %v1263
    %1311 = vmatpush1.bf16.msra.mxu0 %v1262
    %1312 = vmatprep.subr.bf16.mxu0 %v1259
    %1313 = vmatpush1.bf16.msra.mxu0 %v1258
    %1314 = vmatprep.subr.bf16.mxu0 %v1255
    %1315 = vmatpush1.bf16.msra.mxu0 %v1254
    %1316 = vmatprep.subr.bf16.mxu0 %v1251
    %1317 = vmatpush1.bf16.msra.mxu0 %v1250
    %1318 = vmatprep.subr.bf16.mxu0 %v1247
    %1319 = vmatpush1.bf16.msra.mxu0 %v1246
    %1320 = vmatprep.subr.bf16.mxu0 %v1243
    %1321 = vmatpush1.bf16.msra.mxu0 %v1242
    %1322 = vmatprep.subr.bf16.mxu0 0
    %1323 = vmatpush2.bf16.msra.mxu0 0
    %1324 = vmatprep.subr.bf16.mxu0 0
    %1325 = vmatpush2.bf16.msra.mxu0 0
    %1326 = vmatprep.subr.bf16.mxu0 0
    %1327 = vmatpush2.bf16.msra.mxu0 0
    %1328 = vmatprep.subr.bf16.mxu0 0
    %1329 = vmatpush2.bf16.msra.mxu0 0
    %1330 = vmatprep.subr.bf16.mxu0 0
    %1331 = vmatpush2.bf16.msra.mxu0 0
    %1332 = vmatprep.subr.bf16.mxu0 0
    %1333 = vmatpush2.bf16.msra.mxu0 0
    %1334 = vmatprep.subr.bf16.mxu0 0
    %1335 = vmatpush2.bf16.msra.mxu0 0
    %1336 = vmatprep.subr.bf16.mxu0 0
    %1337 = vmatpush2.bf16.msra.mxu0 0
    %1338 = vmatprep.mubr.bf16.mxu0 0
    %1339 = vmatmul.mubr.bf16.gmra.mxu0 %v1130
    %v1340 = vpop.f32.mrf.mxu0
    %v1341 = vadd.f32 0.0, %v1340
    %v1342 = vpop.f32.mrf.mxu0
    %v1343 = vadd.f32 0.0, %v1342
    %v1344 = vpop.f32.mrf.mxu0
    %v1345 = vadd.f32 0.0, %v1344
    %v1346 = vpop.f32.mrf.mxu0
    %v1347 = vadd.f32 0.0, %v1346
    %1348 = vmatprep.mubr.bf16.mxu0 0
    %1349 = vmatmul.mubr.bf16.gmra.mxu0 %v1131
    %v1350 = vpop.f32.mrf.mxu0
    %v1351 = vadd.f32 0.0, %v1350
    %v1352 = vpop.f32.mrf.mxu0
    %v1353 = vadd.f32 0.0, %v1352
    %v1354 = vpop.f32.mrf.mxu0
    %v1355 = vadd.f32 0.0, %v1354
    %v1356 = vpop.f32.mrf.mxu0
    %v1357 = vadd.f32 0.0, %v1356
    %1358 = vmatprep.mubr.bf16.mxu0 0
    %1359 = vmatmul.mubr.bf16.gmra.mxu0 %v1132
    %v1360 = vpop.f32.mrf.mxu0
    %v1361 = vadd.f32 0.0, %v1360
    %v1362 = vpop.f32.mrf.mxu0
    %v1363 = vadd.f32 0.0, %v1362
    %v1364 = vpop.f32.mrf.mxu0
    %v1365 = vadd.f32 0.0, %v1364
    %v1366 = vpop.f32.mrf.mxu0
    %v1367 = vadd.f32 0.0, %v1366
    %1368 = vmatprep.mubr.bf16.mxu0 0
    %1369 = vmatmul.mubr.bf16.gmra.mxu0 %v1133
    %v1370 = vpop.f32.mrf.mxu0
    %v1371 = vadd.f32 0.0, %v1370
    %v1372 = vpop.f32.mrf.mxu0
    %v1373 = vadd.f32 0.0, %v1372
    %v1374 = vpop.f32.mrf.mxu0
    %v1375 = vadd.f32 0.0, %v1374
    %v1376 = vpop.f32.mrf.mxu0
    %v1377 = vadd.f32 0.0, %v1376
    %1378 = vmatprep.mubr.bf16.mxu0 0
    %1379 = vmatmul.mubr.bf16.gmra.mxu0 %v1134
    %v1380 = vpop.f32.mrf.mxu0
    %v1381 = vadd.f32 0.0, %v1380
    %v1382 = vpop.f32.mrf.mxu0
    %v1383 = vadd.f32 0.0, %v1382
    %v1384 = vpop.f32.mrf.mxu0
    %v1385 = vadd.f32 0.0, %v1384
    %v1386 = vpop.f32.mrf.mxu0
    %v1387 = vadd.f32 0.0, %v1386
    %1388 = vmatprep.mubr.bf16.mxu0 0
    %1389 = vmatmul.mubr.bf16.gmra.mxu0 %v1135
    %v1390 = vpop.f32.mrf.mxu0
    %v1391 = vadd.f32 0.0, %v1390
    %v1392 = vpop.f32.mrf.mxu0
    %v1393 = vadd.f32 0.0, %v1392
    %v1394 = vpop.f32.mrf.mxu0
    %v1395 = vadd.f32 0.0, %v1394
    %v1396 = vpop.f32.mrf.mxu0
    %v1397 = vadd.f32 0.0, %v1396
    %1398 = vmatprep.mubr.bf16.mxu0 0
    %1399 = vmatmul.mubr.bf16.gmra.mxu0 %v1136
    %v1400 = vpop.f32.mrf.mxu0
    %v1401 = vadd.f32 0.0, %v1400
    %v1402 = vpop.f32.mrf.mxu0
    %v1403 = vadd.f32 0.0, %v1402
    %v1404 = vpop.f32.mrf.mxu0
    %v1405 = vadd.f32 0.0, %v1404
    %v1406 = vpop.f32.mrf.mxu0
    %v1407 = vadd.f32 0.0, %v1406
    %1408 = vmatprep.mubr.bf16.mxu0 0
    %1409 = vmatmul.mubr.bf16.gmra.mxu0 %v1137
    %v1410 = vpop.f32.mrf.mxu0
    %v1411 = vadd.f32 0.0, %v1410
    %v1412 = vpop.f32.mrf.mxu0
    %v1413 = vadd.f32 0.0, %v1412
    %v1414 = vpop.f32.mrf.mxu0
    %v1415 = vadd.f32 0.0, %v1414
    %v1416 = vpop.f32.mrf.mxu0
    %v1417 = vadd.f32 0.0, %v1416
    %1418 = vmatprep.mubr.bf16.mxu0 0
    %1419 = vmatmul.mubr.bf16.gmra.mxu0 %v1138
    %v1420 = vpop.f32.mrf.mxu0
    %v1421 = vadd.f32 0.0, %v1420
    %v1422 = vpop.f32.mrf.mxu0
    %v1423 = vadd.f32 0.0, %v1422
    %v1424 = vpop.f32.mrf.mxu0
    %v1425 = vadd.f32 0.0, %v1424
    %v1426 = vpop.f32.mrf.mxu0
    %v1427 = vadd.f32 0.0, %v1426
    %1428 = vmatprep.mubr.bf16.mxu0 0
    %1429 = vmatmul.mubr.bf16.gmra.mxu0 %v1139
    %v1430 = vpop.f32.mrf.mxu0
    %v1431 = vadd.f32 0.0, %v1430
    %v1432 = vpop.f32.mrf.mxu0
    %v1433 = vadd.f32 0.0, %v1432
    %v1434 = vpop.f32.mrf.mxu0
    %v1435 = vadd.f32 0.0, %v1434
    %v1436 = vpop.f32.mrf.mxu0
    %v1437 = vadd.f32 0.0, %v1436
    %1438 = vmatprep.mubr.bf16.mxu0 0
    %1439 = vmatmul.mubr.bf16.gmra.mxu0 %v1140
    %v1440 = vpop.f32.mrf.mxu0
    %v1441 = vadd.f32 0.0, %v1440
    %v1442 = vpop.f32.mrf.mxu0
    %v1443 = vadd.f32 0.0, %v1442
    %v1444 = vpop.f32.mrf.mxu0
    %v1445 = vadd.f32 0.0, %v1444
    %v1446 = vpop.f32.mrf.mxu0
    %v1447 = vadd.f32 0.0, %v1446
    %1448 = vmatprep.mubr.bf16.mxu0 0
    %1449 = vmatmul.mubr.bf16.gmra.mxu0 %v1141
    %v1450 = vpop.f32.mrf.mxu0
    %v1451 = vadd.f32 0.0, %v1450
    %v1452 = vpop.f32.mrf.mxu0
    %v1453 = vadd.f32 0.0, %v1452
    %v1454 = vpop.f32.mrf.mxu0
    %v1455 = vadd.f32 0.0, %v1454
    %v1456 = vpop.f32.mrf.mxu0
    %v1457 = vadd.f32 0.0, %v1456
    %1458 = vmatprep.mubr.bf16.mxu0 0
    %1459 = vmatmul.mubr.bf16.gmra.mxu0 %v1142
    %v1460 = vpop.f32.mrf.mxu0
    %v1461 = vadd.f32 0.0, %v1460
    %v1462 = vpop.f32.mrf.mxu0
    %v1463 = vadd.f32 0.0, %v1462
    %v1464 = vpop.f32.mrf.mxu0
    %v1465 = vadd.f32 0.0, %v1464
    %v1466 = vpop.f32.mrf.mxu0
    %v1467 = vadd.f32 0.0, %v1466
    %1468 = vmatprep.mubr.bf16.mxu0 0
    %1469 = vmatmul.mubr.bf16.gmra.mxu0 %v1143
    %v1470 = vpop.f32.mrf.mxu0
    %v1471 = vadd.f32 0.0, %v1470
    %v1472 = vpop.f32.mrf.mxu0
    %v1473 = vadd.f32 0.0, %v1472
    %v1474 = vpop.f32.mrf.mxu0
    %v1475 = vadd.f32 0.0, %v1474
    %v1476 = vpop.f32.mrf.mxu0
    %v1477 = vadd.f32 0.0, %v1476
    %1478 = vmatprep.mubr.bf16.mxu0 0
    %1479 = vmatmul.mubr.bf16.gmra.mxu0 %v1144
    %v1480 = vpop.f32.mrf.mxu0
    %v1481 = vadd.f32 0.0, %v1480
    %v1482 = vpop.f32.mrf.mxu0
    %v1483 = vadd.f32 0.0, %v1482
    %v1484 = vpop.f32.mrf.mxu0
    %v1485 = vadd.f32 0.0, %v1484
    %v1486 = vpop.f32.mrf.mxu0
    %v1487 = vadd.f32 0.0, %v1486
    %1488 = vmatprep.mubr.bf16.mxu0 0
    %1489 = vmatmul.mubr.bf16.gmra.mxu0 %v1145
    %v1490 = vpop.f32.mrf.mxu0
    %v1491 = vadd.f32 0.0, %v1490
    %v1492 = vpop.f32.mrf.mxu0
    %v1493 = vadd.f32 0.0, %v1492
    %v1494 = vpop.f32.mrf.mxu0
    %v1495 = vadd.f32 0.0, %v1494
    %v1496 = vpop.f32.mrf.mxu0
    %v1497 = vadd.f32 0.0, %v1496
    %1498 = vdwg.mxu0
    %1499 = vmatprep.subr.bf16.mxu0 %v1273
    %1500 = vmatpush1.bf16.msra.mxu0 %v1272
    %1501 = vmatprep.subr.bf16.mxu0 %v1269
    %1502 = vmatpush1.bf16.msra.mxu0 %v1268
    %1503 = vmatprep.subr.bf16.mxu0 %v1265
    %1504 = vmatpush1.bf16.msra.mxu0 %v1264
    %1505 = vmatprep.subr.bf16.mxu0 %v1261
    %1506 = vmatpush1.bf16.msra.mxu0 %v1260
    %1507 = vmatprep.subr.bf16.mxu0 %v1257
    %1508 = vmatpush1.bf16.msra.mxu0 %v1256
    %1509 = vmatprep.subr.bf16.mxu0 %v1253
    %1510 = vmatpush1.bf16.msra.mxu0 %v1252
    %1511 = vmatprep.subr.bf16.mxu0 %v1249
    %1512 = vmatpush1.bf16.msra.mxu0 %v1248
    %1513 = vmatprep.subr.bf16.mxu0 %v1245
    %1514 = vmatpush1.bf16.msra.mxu0 %v1244
    %1515 = vmatprep.subr.bf16.mxu0 0
    %1516 = vmatpush2.bf16.msra.mxu0 0
    %1517 = vmatprep.subr.bf16.mxu0 0
    %1518 = vmatpush2.bf16.msra.mxu0 0
    %1519 = vmatprep.subr.bf16.mxu0 0
    %1520 = vmatpush2.bf16.msra.mxu0 0
    %1521 = vmatprep.subr.bf16.mxu0 0
    %1522 = vmatpush2.bf16.msra.mxu0 0
    %1523 = vmatprep.subr.bf16.mxu0 0
    %1524 = vmatpush2.bf16.msra.mxu0 0
    %1525 = vmatprep.subr.bf16.mxu0 0
    %1526 = vmatpush2.bf16.msra.mxu0 0
    %1527 = vmatprep.subr.bf16.mxu0 0
    %1528 = vmatpush2.bf16.msra.mxu0 0
    %1529 = vmatprep.subr.bf16.mxu0 0
    %1530 = vmatpush2.bf16.msra.mxu0 0
    %1531 = vmatprep.mubr.bf16.mxu0 0
    %1532 = vmatmul.mubr.bf16.gmra.mxu0 %v1130
    %v1533 = vpop.f32.mrf.mxu0
    %v1534 = vadd.f32 0.0, %v1533
    %v1535 = vpop.f32.mrf.mxu0
    %v1536 = vadd.f32 0.0, %v1535
    %v1537 = vpop.f32.mrf.mxu0
    %v1538 = vadd.f32 0.0, %v1537
    %v1539 = vpop.f32.mrf.mxu0
    %v1540 = vadd.f32 0.0, %v1539
    %1541 = vmatprep.mubr.bf16.mxu0 0
    %1542 = vmatmul.mubr.bf16.gmra.mxu0 %v1131
    %v1543 = vpop.f32.mrf.mxu0
    %v1544 = vadd.f32 0.0, %v1543
    %v1545 = vpop.f32.mrf.mxu0
    %v1546 = vadd.f32 0.0, %v1545
    %v1547 = vpop.f32.mrf.mxu0
    %v1548 = vadd.f32 0.0, %v1547
    %v1549 = vpop.f32.mrf.mxu0
    %v1550 = vadd.f32 0.0, %v1549
    %1551 = vmatprep.mubr.bf16.mxu0 0
    %1552 = vmatmul.mubr.bf16.gmra.mxu0 %v1132
    %v1553 = vpop.f32.mrf.mxu0
    %v1554 = vadd.f32 0.0, %v1553
    %v1555 = vpop.f32.mrf.mxu0
    %v1556 = vadd.f32 0.0, %v1555
    %v1557 = vpop.f32.mrf.mxu0
    %v1558 = vadd.f32 0.0, %v1557
    %v1559 = vpop.f32.mrf.mxu0
    %v1560 = vadd.f32 0.0, %v1559
    %1561 = vmatprep.mubr.bf16.mxu0 0
    %1562 = vmatmul.mubr.bf16.gmra.mxu0 %v1133
    %v1563 = vpop.f32.mrf.mxu0
    %v1564 = vadd.f32 0.0, %v1563
    %v1565 = vpop.f32.mrf.mxu0
    %v1566 = vadd.f32 0.0, %v1565
    %v1567 = vpop.f32.mrf.mxu0
    %v1568 = vadd.f32 0.0, %v1567
    %v1569 = vpop.f32.mrf.mxu0
    %v1570 = vadd.f32 0.0, %v1569
    %1571 = vmatprep.mubr.bf16.mxu0 0
    %1572 = vmatmul.mubr.bf16.gmra.mxu0 %v1134
    %v1573 = vpop.f32.mrf.mxu0
    %v1574 = vadd.f32 0.0, %v1573
    %v1575 = vpop.f32.mrf.mxu0
    %v1576 = vadd.f32 0.0, %v1575
    %v1577 = vpop.f32.mrf.mxu0
    %v1578 = vadd.f32 0.0, %v1577
    %v1579 = vpop.f32.mrf.mxu0
    %v1580 = vadd.f32 0.0, %v1579
    %1581 = vmatprep.mubr.bf16.mxu0 0
    %1582 = vmatmul.mubr.bf16.gmra.mxu0 %v1135
    %v1583 = vpop.f32.mrf.mxu0
    %v1584 = vadd.f32 0.0, %v1583
    %v1585 = vpop.f32.mrf.mxu0
    %v1586 = vadd.f32 0.0, %v1585
    %v1587 = vpop.f32.mrf.mxu0
    %v1588 = vadd.f32 0.0, %v1587
    %v1589 = vpop.f32.mrf.mxu0
    %v1590 = vadd.f32 0.0, %v1589
    %1591 = vmatprep.mubr.bf16.mxu0 0
    %1592 = vmatmul.mubr.bf16.gmra.mxu0 %v1136
    %v1593 = vpop.f32.mrf.mxu0
    %v1594 = vadd.f32 0.0, %v1593
    %v1595 = vpop.f32.mrf.mxu0
    %v1596 = vadd.f32 0.0, %v1595
    %v1597 = vpop.f32.mrf.mxu0
    %v1598 = vadd.f32 0.0, %v1597
    %v1599 = vpop.f32.mrf.mxu0
    %v1600 = vadd.f32 0.0, %v1599
    %1601 = vmatprep.mubr.bf16.mxu0 0
    %1602 = vmatmul.mubr.bf16.gmra.mxu0 %v1137
    %v1603 = vpop.f32.mrf.mxu0
    %v1604 = vadd.f32 0.0, %v1603
    %v1605 = vpop.f32.mrf.mxu0
    %v1606 = vadd.f32 0.0, %v1605
    %v1607 = vpop.f32.mrf.mxu0
    %v1608 = vadd.f32 0.0, %v1607
    %v1609 = vpop.f32.mrf.mxu0
    %v1610 = vadd.f32 0.0, %v1609
    %1611 = vmatprep.mubr.bf16.mxu0 0
    %1612 = vmatmul.mubr.bf16.gmra.mxu0 %v1138
    %v1613 = vpop.f32.mrf.mxu0
    %v1614 = vadd.f32 0.0, %v1613
    %v1615 = vpop.f32.mrf.mxu0
    %v1616 = vadd.f32 0.0, %v1615
    %v1617 = vpop.f32.mrf.mxu0
    %v1618 = vadd.f32 0.0, %v1617
    %v1619 = vpop.f32.mrf.mxu0
    %v1620 = vadd.f32 0.0, %v1619
    %1621 = vmatprep.mubr.bf16.mxu0 0
    %1622 = vmatmul.mubr.bf16.gmra.mxu0 %v1139
    %v1623 = vpop.f32.mrf.mxu0
    %v1624 = vadd.f32 0.0, %v1623
    %v1625 = vpop.f32.mrf.mxu0
    %v1626 = vadd.f32 0.0, %v1625
    %v1627 = vpop.f32.mrf.mxu0
    %v1628 = vadd.f32 0.0, %v1627
    %v1629 = vpop.f32.mrf.mxu0
    %v1630 = vadd.f32 0.0, %v1629
    %1631 = vmatprep.mubr.bf16.mxu0 0
    %1632 = vmatmul.mubr.bf16.gmra.mxu0 %v1140
    %v1633 = vpop.f32.mrf.mxu0
    %v1634 = vadd.f32 0.0, %v1633
    %v1635 = vpop.f32.mrf.mxu0
    %v1636 = vadd.f32 0.0, %v1635
    %v1637 = vpop.f32.mrf.mxu0
    %v1638 = vadd.f32 0.0, %v1637
    %v1639 = vpop.f32.mrf.mxu0
    %v1640 = vadd.f32 0.0, %v1639
    %1641 = vmatprep.mubr.bf16.mxu0 0
    %1642 = vmatmul.mubr.bf16.gmra.mxu0 %v1141
    %v1643 = vpop.f32.mrf.mxu0
    %v1644 = vadd.f32 0.0, %v1643
    %v1645 = vpop.f32.mrf.mxu0
    %v1646 = vadd.f32 0.0, %v1645
    %v1647 = vpop.f32.mrf.mxu0
    %v1648 = vadd.f32 0.0, %v1647
    %v1649 = vpop.f32.mrf.mxu0
    %v1650 = vadd.f32 0.0, %v1649
    %1651 = vmatprep.mubr.bf16.mxu0 0
    %1652 = vmatmul.mubr.bf16.gmra.mxu0 %v1142
    %v1653 = vpop.f32.mrf.mxu0
    %v1654 = vadd.f32 0.0, %v1653
    %v1655 = vpop.f32.mrf.mxu0
    %v1656 = vadd.f32 0.0, %v1655
    %v1657 = vpop.f32.mrf.mxu0
    %v1658 = vadd.f32 0.0, %v1657
    %v1659 = vpop.f32.mrf.mxu0
    %v1660 = vadd.f32 0.0, %v1659
    %1661 = vmatprep.mubr.bf16.mxu0 0
    %1662 = vmatmul.mubr.bf16.gmra.mxu0 %v1143
    %v1663 = vpop.f32.mrf.mxu0
    %v1664 = vadd.f32 0.0, %v1663
    %v1665 = vpop.f32.mrf.mxu0
    %v1666 = vadd.f32 0.0, %v1665
    %v1667 = vpop.f32.mrf.mxu0
    %v1668 = vadd.f32 0.0, %v1667
    %v1669 = vpop.f32.mrf.mxu0
    %v1670 = vadd.f32 0.0, %v1669
    %1671 = vmatprep.mubr.bf16.mxu0 0
    %1672 = vmatmul.mubr.bf16.gmra.mxu0 %v1144
    %v1673 = vpop.f32.mrf.mxu0
    %v1674 = vadd.f32 0.0, %v1673
    %v1675 = vpop.f32.mrf.mxu0
    %v1676 = vadd.f32 0.0, %v1675
    %v1677 = vpop.f32.mrf.mxu0
    %v1678 = vadd.f32 0.0, %v1677
    %v1679 = vpop.f32.mrf.mxu0
    %v1680 = vadd.f32 0.0, %v1679
    %1681 = vmatprep.mubr.bf16.mxu0 0
    %1682 = vmatmul.mubr.bf16.gmra.mxu0 %v1145
    %v1683 = vpop.f32.mrf.mxu0
    %v1684 = vadd.f32 0.0, %v1683
    %v1685 = vpop.f32.mrf.mxu0
    %v1686 = vadd.f32 0.0, %v1685
    %v1687 = vpop.f32.mrf.mxu0
    %v1688 = vadd.f32 0.0, %v1687
    %v1689 = vpop.f32.mrf.mxu0
    %v1690 = vadd.f32 0.0, %v1689
    %1691 = vdwg.mxu0
    %v1692 = vmax.f32 %v1341, %v1345
    %v1693 = vmax.f32 %v1692, %v1351
    %v1694 = vmax.f32 %v1693, %v1355
    %v1695 = vmax.f32 %v1694, %v1361
    %v1696 = vmax.f32 %v1695, %v1365
    %v1697 = vmax.f32 %v1696, %v1371
    %v1698 = vmax.f32 %v1697, %v1375
    %v1699 = vmax.f32 %v1698, %v1381
    %v1700 = vmax.f32 %v1699, %v1385
    %v1701 = vmax.f32 %v1700, %v1391
    %v1702 = vmax.f32 %v1701, %v1395
    %v1703 = vmax.f32 %v1702, %v1401
    %v1704 = vmax.f32 %v1703, %v1405
    %v1705 = vmax.f32 %v1704, %v1411
    %v1706 = vmax.f32 %v1705, %v1415
    %v1707 = vrot.slane %v1706, 4
    %v1708 = vmax.f32 %v1706, %v1707
    %v1709 = vrot.slane %v1708, 2
    %v1710 = vmax.f32 %v1708, %v1709
    %v1711 = vrot.slane %v1710, 1
    %v1712 = vmax.f32 %v1710, %v1711
    %v1713 = vmax.f32 %v1343, %v1347
    %v1714 = vmax.f32 %v1713, %v1353
    %v1715 = vmax.f32 %v1714, %v1357
    %v1716 = vmax.f32 %v1715, %v1363
    %v1717 = vmax.f32 %v1716, %v1367
    %v1718 = vmax.f32 %v1717, %v1373
    %v1719 = vmax.f32 %v1718, %v1377
    %v1720 = vmax.f32 %v1719, %v1383
    %v1721 = vmax.f32 %v1720, %v1387
    %v1722 = vmax.f32 %v1721, %v1393
    %v1723 = vmax.f32 %v1722, %v1397
    %v1724 = vmax.f32 %v1723, %v1403
    %v1725 = vmax.f32 %v1724, %v1407
    %v1726 = vmax.f32 %v1725, %v1413
    %v1727 = vmax.f32 %v1726, %v1417
    %v1728 = vrot.slane %v1727, 4
    %v1729 = vmax.f32 %v1727, %v1728
    %v1730 = vrot.slane %v1729, 2
    %v1731 = vmax.f32 %v1729, %v1730
    %v1732 = vrot.slane %v1731, 1
    %v1733 = vmax.f32 %v1731, %v1732
    %v1734 = vmax.f32 %v1534, %v1538
    %v1735 = vmax.f32 %v1734, %v1544
    %v1736 = vmax.f32 %v1735, %v1548
    %v1737 = vmax.f32 %v1736, %v1554
    %v1738 = vmax.f32 %v1737, %v1558
    %v1739 = vmax.f32 %v1738, %v1564
    %v1740 = vmax.f32 %v1739, %v1568
    %v1741 = vmax.f32 %v1740, %v1574
    %v1742 = vmax.f32 %v1741, %v1578
    %v1743 = vmax.f32 %v1742, %v1584
    %v1744 = vmax.f32 %v1743, %v1588
    %v1745 = vmax.f32 %v1744, %v1594
    %v1746 = vmax.f32 %v1745, %v1598
    %v1747 = vmax.f32 %v1746, %v1604
    %v1748 = vmax.f32 %v1747, %v1608
    %v1749 = vrot.slane %v1748, 4
    %v1750 = vmax.f32 %v1748, %v1749
    %v1751 = vrot.slane %v1750, 2
    %v1752 = vmax.f32 %v1750, %v1751
    %v1753 = vrot.slane %v1752, 1
    %v1754 = vmax.f32 %v1752, %v1753
    %v1755 = vmax.f32 %v1536, %v1540
    %v1756 = vmax.f32 %v1755, %v1546
    %v1757 = vmax.f32 %v1756, %v1550
    %v1758 = vmax.f32 %v1757, %v1556
    %v1759 = vmax.f32 %v1758, %v1560
    %v1760 = vmax.f32 %v1759, %v1566
    %v1761 = vmax.f32 %v1760, %v1570
    %v1762 = vmax.f32 %v1761, %v1576
    %v1763 = vmax.f32 %v1762, %v1580
    %v1764 = vmax.f32 %v1763, %v1586
    %v1765 = vmax.f32 %v1764, %v1590
    %v1766 = vmax.f32 %v1765, %v1596
    %v1767 = vmax.f32 %v1766, %v1600
    %v1768 = vmax.f32 %v1767, %v1606
    %v1769 = vmax.f32 %v1768, %v1610
    %v1770 = vrot.slane %v1769, 4
    %v1771 = vmax.f32 %v1769, %v1770
    %v1772 = vrot.slane %v1771, 2
    %v1773 = vmax.f32 %v1771, %v1772
    %v1774 = vrot.slane %v1773, 1
    %v1775 = vmax.f32 %v1773, %v1774
    %v1776 = vmax.f32 %v1421, %v1425
    %v1777 = vmax.f32 %v1776, %v1431
    %v1778 = vmax.f32 %v1777, %v1435
    %v1779 = vmax.f32 %v1778, %v1441
    %v1780 = vmax.f32 %v1779, %v1445
    %v1781 = vmax.f32 %v1780, %v1451
    %v1782 = vmax.f32 %v1781, %v1455
    %v1783 = vmax.f32 %v1782, %v1461
    %v1784 = vmax.f32 %v1783, %v1465
    %v1785 = vmax.f32 %v1784, %v1471
    %v1786 = vmax.f32 %v1785, %v1475
    %v1787 = vmax.f32 %v1786, %v1481
    %v1788 = vmax.f32 %v1787, %v1485
    %v1789 = vmax.f32 %v1788, %v1491
    %v1790 = vmax.f32 %v1789, %v1495
    %v1791 = vrot.slane %v1790, 4
    %v1792 = vmax.f32 %v1790, %v1791
    %v1793 = vrot.slane %v1792, 2
    %v1794 = vmax.f32 %v1792, %v1793
    %v1795 = vrot.slane %v1794, 1
    %v1796 = vmax.f32 %v1794, %v1795
    %v1797 = vmax.f32 %v1423, %v1427
    %v1798 = vmax.f32 %v1797, %v1433
    %v1799 = vmax.f32 %v1798, %v1437
    %v1800 = vmax.f32 %v1799, %v1443
    %v1801 = vmax.f32 %v1800, %v1447
    %v1802 = vmax.f32 %v1801, %v1453
    %v1803 = vmax.f32 %v1802, %v1457
    %v1804 = vmax.f32 %v1803, %v1463
    %v1805 = vmax.f32 %v1804, %v1467
    %v1806 = vmax.f32 %v1805, %v1473
    %v1807 = vmax.f32 %v1806, %v1477
    %v1808 = vmax.f32 %v1807, %v1483
    %v1809 = vmax.f32 %v1808, %v1487
    %v1810 = vmax.f32 %v1809, %v1493
    %v1811 = vmax.f32 %v1810, %v1497
    %v1812 = vrot.slane %v1811, 4
    %v1813 = vmax.f32 %v1811, %v1812
    %v1814 = vrot.slane %v1813, 2
    %v1815 = vmax.f32 %v1813, %v1814
    %v1816 = vrot.slane %v1815, 1
    %v1817 = vmax.f32 %v1815, %v1816
    %v1818 = vmax.f32 %v1614, %v1618
    %v1819 = vmax.f32 %v1818, %v1624
    %v1820 = vmax.f32 %v1819, %v1628
    %v1821 = vmax.f32 %v1820, %v1634
    %v1822 = vmax.f32 %v1821, %v1638
    %v1823 = vmax.f32 %v1822, %v1644
    %v1824 = vmax.f32 %v1823, %v1648
    %v1825 = vmax.f32 %v1824, %v1654
    %v1826 = vmax.f32 %v1825, %v1658
    %v1827 = vmax.f32 %v1826, %v1664
    %v1828 = vmax.f32 %v1827, %v1668
    %v1829 = vmax.f32 %v1828, %v1674
    %v1830 = vmax.f32 %v1829, %v1678
    %v1831 = vmax.f32 %v1830, %v1684
    %v1832 = vmax.f32 %v1831, %v1688
    %v1833 = vrot.slane %v1832, 4
    %v1834 = vmax.f32 %v1832, %v1833
    %v1835 = vrot.slane %v1834, 2
    %v1836 = vmax.f32 %v1834, %v1835
    %v1837 = vrot.slane %v1836, 1
    %v1838 = vmax.f32 %v1836, %v1837
    %v1839 = vmax.f32 %v1616, %v1620
    %v1840 = vmax.f32 %v1839, %v1626
    %v1841 = vmax.f32 %v1840, %v1630
    %v1842 = vmax.f32 %v1841, %v1636
    %v1843 = vmax.f32 %v1842, %v1640
    %v1844 = vmax.f32 %v1843, %v1646
    %v1845 = vmax.f32 %v1844, %v1650
    %v1846 = vmax.f32 %v1845, %v1656
    %v1847 = vmax.f32 %v1846, %v1660
    %v1848 = vmax.f32 %v1847, %v1666
    %v1849 = vmax.f32 %v1848, %v1670
    %v1850 = vmax.f32 %v1849, %v1676
    %v1851 = vmax.f32 %v1850, %v1680
    %v1852 = vmax.f32 %v1851, %v1686
    %v1853 = vmax.f32 %v1852, %v1690
    %v1854 = vrot.slane %v1853, 4
    %v1855 = vmax.f32 %v1853, %v1854
    %v1856 = vrot.slane %v1855, 2
    %v1857 = vmax.f32 %v1855, %v1856
    %v1858 = vrot.slane %v1857, 1
    %v1859 = vmax.f32 %v1857, %v1858
    %s1860 = scalar_lea.vmem %s9, 2
    %v1861 = vld [vmem:[%s1860] ss:$8 sm:$0xf]
    %v1863 = vlaneseq
    %v1864 = vshrl.u32 %v1863, 7
    %v1865 = vsub.s32 0, %v1864
    %v1866 = vrot.slane %v1861, %v1865
    %v1867 = vlaneseq
    %v1868 = vshrl.u32 %v1867, 7
    %v1869 = vsub.s32 1, %v1868
    %v1870 = vrot.slane %v1861, %v1869
    %v1871 = vlaneseq
    %v1872 = vshrl.u32 %v1871, 7
    %v1873 = vsub.s32 2, %v1872
    %v1874 = vrot.slane %v1861, %v1873
    %v1875 = vlaneseq
    %v1876 = vshrl.u32 %v1875, 7
    %v1877 = vsub.s32 3, %v1876
    %v1878 = vrot.slane %v1861, %v1877
    %v1883 = vadd.f32 %v1712, %v1866
    %v1884 = vadd.f32 %v1733, %v1870
    %v1885 = vadd.f32 %v1754, %v1874
    %v1886 = vadd.f32 %v1775, %v1878
    %v1887 = vadd.f32 %v1796, %v1866
    %v1888 = vadd.f32 %v1817, %v1870
    %v1889 = vadd.f32 %v1838, %v1874
    %v1890 = vadd.f32 %v1859, %v1878
    %v1891 = vmax.f32 %v1883, 0.0
    %v1892 = vmax.f32 %v1884, 0.0
    %v1893 = vmax.f32 %v1885, 0.0
    %v1894 = vmax.f32 %v1886, 0.0
    %v1895 = vmax.f32 %v1887, 0.0
    %v1896 = vmax.f32 %v1888, 0.0
    %v1897 = vmax.f32 %v1889, 0.0
    %v1898 = vmax.f32 %v1890, 0.0
    %v1899 = vld [vmem:[%s4] sm:$0xf]
    %v1900 = vld [vmem:[%s4 + $0x4] sm:$0xf]
    %v1901 = vld [vmem:[%s4 + $0x8] sm:$0xf]
    %v1902 = vld [vmem:[%s4 + $0xc] sm:$0xf]
    %v1903 = vld [vmem:[%s4 + $0x10] sm:$0xf]
    %v1904 = vld [vmem:[%s4 + $0x14] sm:$0xf]
    %v1905 = vld [vmem:[%s4 + $0x18] sm:$0xf]
    %v1906 = vld [vmem:[%s4 + $0x1c] sm:$0xf]
    %v1907 = vld [vmem:[%s4 + $0x20] sm:$0xf]
    %v1908 = vld [vmem:[%s4 + $0x24] sm:$0xf]
    %v1909 = vld [vmem:[%s4 + $0x28] sm:$0xf]
    %v1910 = vld [vmem:[%s4 + $0x2c] sm:$0xf]
    %v1911 = vld [vmem:[%s4 + $0x30] sm:$0xf]
    %v1912 = vld [vmem:[%s4 + $0x34] sm:$0xf]
    %v1913 = vld [vmem:[%s4 + $0x38] sm:$0xf]
    %v1914 = vld [vmem:[%s4 + $0x3c] sm:$0xf]
    %v1915 = vld [vmem:[%s4 + $0x40] sm:$0xf]
    %v1916 = vld [vmem:[%s4 + $0x44] sm:$0xf]
    %v1917 = vld [vmem:[%s4 + $0x48] sm:$0xf]
    %v1918 = vld [vmem:[%s4 + $0x4c] sm:$0xf]
    %v1919 = vld [vmem:[%s4 + $0x50] sm:$0xf]
    %v1920 = vld [vmem:[%s4 + $0x54] sm:$0xf]
    %v1921 = vld [vmem:[%s4 + $0x58] sm:$0xf]
    %v1922 = vld [vmem:[%s4 + $0x5c] sm:$0xf]
    %v1923 = vld [vmem:[%s4 + $0x60] sm:$0xf]
    %v1924 = vld [vmem:[%s4 + $0x64] sm:$0xf]
    %v1925 = vld [vmem:[%s4 + $0x68] sm:$0xf]
    %v1926 = vld [vmem:[%s4 + $0x6c] sm:$0xf]
    %v1927 = vld [vmem:[%s4 + $0x70] sm:$0xf]
    %v1928 = vld [vmem:[%s4 + $0x74] sm:$0xf]
    %v1929 = vld [vmem:[%s4 + $0x78] sm:$0xf]
    %v1930 = vld [vmem:[%s4 + $0x7c] sm:$0xf]
    %v1931 = vld [vmem:[%s4 + $0x80] sm:$0xf]
    %v1932 = vld [vmem:[%s4 + $0x84] sm:$0xf]
    %v1933 = vld [vmem:[%s4 + $0x88] sm:$0xf]
    %v1934 = vld [vmem:[%s4 + $0x8c] sm:$0xf]
    %v1935 = vld [vmem:[%s4 + $0x90] sm:$0xf]
    %v1936 = vld [vmem:[%s4 + $0x94] sm:$0xf]
    %v1937 = vld [vmem:[%s4 + $0x98] sm:$0xf]
    %v1938 = vld [vmem:[%s4 + $0x9c] sm:$0xf]
    %v1939 = vld [vmem:[%s4 + $0xa0] sm:$0xf]
    %v1940 = vld [vmem:[%s4 + $0xa4] sm:$0xf]
    %v1941 = vld [vmem:[%s4 + $0xa8] sm:$0xf]
    %v1942 = vld [vmem:[%s4 + $0xac] sm:$0xf]
    %v1943 = vld [vmem:[%s4 + $0xb0] sm:$0xf]
    %v1944 = vld [vmem:[%s4 + $0xb4] sm:$0xf]
    %v1945 = vld [vmem:[%s4 + $0xb8] sm:$0xf]
    %v1946 = vld [vmem:[%s4 + $0xbc] sm:$0xf]
    %v1947 = vld [vmem:[%s4 + $0xc0] sm:$0xf]
    %v1948 = vld [vmem:[%s4 + $0xc4] sm:$0xf]
    %v1949 = vld [vmem:[%s4 + $0xc8] sm:$0xf]
    %v1950 = vld [vmem:[%s4 + $0xcc] sm:$0xf]
    %v1951 = vld [vmem:[%s4 + $0xd0] sm:$0xf]
    %v1952 = vld [vmem:[%s4 + $0xd4] sm:$0xf]
    %v1953 = vld [vmem:[%s4 + $0xd8] sm:$0xf]
    %v1954 = vld [vmem:[%s4 + $0xdc] sm:$0xf]
    %v1955 = vld [vmem:[%s4 + $0xe0] sm:$0xf]
    %v1956 = vld [vmem:[%s4 + $0xe4] sm:$0xf]
    %v1957 = vld [vmem:[%s4 + $0xe8] sm:$0xf]
    %v1958 = vld [vmem:[%s4 + $0xec] sm:$0xf]
    %v1959 = vld [vmem:[%s4 + $0xf0] sm:$0xf]
    %v1960 = vld [vmem:[%s4 + $0xf4] sm:$0xf]
    %v1961 = vld [vmem:[%s4 + $0xf8] sm:$0xf]
    %v1962 = vld [vmem:[%s4 + $0xfc] sm:$0xf]
    %v1963 = vpack.c.bf16 %v1891, %v1891
    %v1964 = vpack.c.bf16 %v1892, %v1892
    %v1965 = vpack.c.bf16 %v1893, %v1893
    %v1966 = vpack.c.bf16 %v1894, %v1894
    %v1967 = vpack.c.bf16 %v1895, %v1895
    %v1968 = vpack.c.bf16 %v1896, %v1896
    %v1969 = vpack.c.bf16 %v1897, %v1897
    %v1970 = vpack.c.bf16 %v1898, %v1898
    %v1971 = vld [vmem:[%s9 + $0x3] ss:$0 sm:$0xff]
    %v1980 = vunpack.c.l.b16 %v1963
    %v1981 = vunpack.c.l.b16 %v1964
    %v1982 = vunpack.c.l.b16 %v1965
    %v1983 = vunpack.c.l.b16 %v1966
    %v1984 = vunpack.c.l.b16 %v1967
    %v1985 = vunpack.c.l.b16 %v1968
    %v1986 = vunpack.c.l.b16 %v1969
    %v1987 = vunpack.c.l.b16 %v1970
    %v1988 = vrot.slane %v1984, 7
    %vm1989 = vcmask 1041409
    %v1990 = vsel %vm1989, %v1988, %v1980
    %v1991 = vrot.slane %v1985, 7
    %v1992 = vsel %vm1989, %v1991, %v1981
    %v1993 = vrot.slane %v1986, 7
    %v1994 = vsel %vm1989, %v1993, %v1982
    %v1995 = vrot.slane %v1987, 7
    %v1996 = vsel %vm1989, %v1995, %v1983
    %v1997 = vpack.c.b16 %v1990, %v1990
    %v1998 = vpack.c.b16 %v1992, %v1992
    %v1999 = vpack.c.b16 %v1994, %v1994
    %v2000 = vpack.c.b16 %v1996, %v1996
    %v2069 = vunpack.c.l.b16 %v1899
    %v2070 = vunpack.c.l.b16 %v1900
    %v2071 = vunpack.c.l.b16 %v1901
    %v2072 = vunpack.c.l.b16 %v1902
    %v2073 = vunpack.c.l.b16 %v1903
    %v2074 = vunpack.c.l.b16 %v1904
    %v2075 = vunpack.c.l.b16 %v1905
    %v2076 = vunpack.c.l.b16 %v1906
    %v2077 = vunpack.c.l.b16 %v1907
    %v2078 = vunpack.c.l.b16 %v1908
    %v2079 = vunpack.c.l.b16 %v1909
    %v2080 = vunpack.c.l.b16 %v1910
    %v2081 = vunpack.c.l.b16 %v1911
    %v2082 = vunpack.c.l.b16 %v1912
    %v2083 = vunpack.c.l.b16 %v1913
    %v2084 = vunpack.c.l.b16 %v1914
    %v2085 = vunpack.c.l.b16 %v1915
    %v2086 = vunpack.c.l.b16 %v1916
    %v2087 = vunpack.c.l.b16 %v1917
    %v2088 = vunpack.c.l.b16 %v1918
    %v2089 = vunpack.c.l.b16 %v1919
    %v2090 = vunpack.c.l.b16 %v1920
    %v2091 = vunpack.c.l.b16 %v1921
    %v2092 = vunpack.c.l.b16 %v1922
    %v2093 = vunpack.c.l.b16 %v1923
    %v2094 = vunpack.c.l.b16 %v1924
    %v2095 = vunpack.c.l.b16 %v1925
    %v2096 = vunpack.c.l.b16 %v1926
    %v2097 = vunpack.c.l.b16 %v1927
    %v2098 = vunpack.c.l.b16 %v1928
    %v2099 = vunpack.c.l.b16 %v1929
    %v2100 = vunpack.c.l.b16 %v1930
    %v2101 = vunpack.c.l.b16 %v1931
    %v2102 = vunpack.c.l.b16 %v1932
    %v2103 = vunpack.c.l.b16 %v1933
    %v2104 = vunpack.c.l.b16 %v1934
    %v2105 = vunpack.c.l.b16 %v1935
    %v2106 = vunpack.c.l.b16 %v1936
    %v2107 = vunpack.c.l.b16 %v1937
    %v2108 = vunpack.c.l.b16 %v1938
    %v2109 = vunpack.c.l.b16 %v1939
    %v2110 = vunpack.c.l.b16 %v1940
    %v2111 = vunpack.c.l.b16 %v1941
    %v2112 = vunpack.c.l.b16 %v1942
    %v2113 = vunpack.c.l.b16 %v1943
    %v2114 = vunpack.c.l.b16 %v1944
    %v2115 = vunpack.c.l.b16 %v1945
    %v2116 = vunpack.c.l.b16 %v1946
    %v2117 = vunpack.c.l.b16 %v1947
    %v2118 = vunpack.c.l.b16 %v1948
    %v2119 = vunpack.c.l.b16 %v1949
    %v2120 = vunpack.c.l.b16 %v1950
    %v2121 = vunpack.c.l.b16 %v1951
    %v2122 = vunpack.c.l.b16 %v1952
    %v2123 = vunpack.c.l.b16 %v1953
    %v2124 = vunpack.c.l.b16 %v1954
    %v2125 = vunpack.c.l.b16 %v1955
    %v2126 = vunpack.c.l.b16 %v1956
    %v2127 = vunpack.c.l.b16 %v1957
    %v2128 = vunpack.c.l.b16 %v1958
    %v2129 = vunpack.c.l.b16 %v1959
    %v2130 = vunpack.c.l.b16 %v1960
    %v2131 = vunpack.c.l.b16 %v1961
    %v2132 = vunpack.c.l.b16 %v1962
    %v2133 = vpack.c.b16 %v2070, %v2069
    %v2134 = vpack.c.b16 %v2072, %v2071
    %v2135 = vpack.c.b16 %v2074, %v2073
    %v2136 = vpack.c.b16 %v2076, %v2075
    %v2137 = vpack.c.b16 %v2078, %v2077
    %v2138 = vpack.c.b16 %v2080, %v2079
    %v2139 = vpack.c.b16 %v2082, %v2081
    %v2140 = vpack.c.b16 %v2084, %v2083
    %v2141 = vpack.c.b16 %v2086, %v2085
    %v2142 = vpack.c.b16 %v2088, %v2087
    %v2143 = vpack.c.b16 %v2090, %v2089
    %v2144 = vpack.c.b16 %v2092, %v2091
    %v2145 = vpack.c.b16 %v2094, %v2093
    %v2146 = vpack.c.b16 %v2096, %v2095
    %v2147 = vpack.c.b16 %v2098, %v2097
    %v2148 = vpack.c.b16 %v2100, %v2099
    %v2149 = vpack.c.b16 %v2102, %v2101
    %v2150 = vpack.c.b16 %v2104, %v2103
    %v2151 = vpack.c.b16 %v2106, %v2105
    %v2152 = vpack.c.b16 %v2108, %v2107
    %v2153 = vpack.c.b16 %v2110, %v2109
    %v2154 = vpack.c.b16 %v2112, %v2111
    %v2155 = vpack.c.b16 %v2114, %v2113
    %v2156 = vpack.c.b16 %v2116, %v2115
    %v2157 = vpack.c.b16 %v2118, %v2117
    %v2158 = vpack.c.b16 %v2120, %v2119
    %v2159 = vpack.c.b16 %v2122, %v2121
    %v2160 = vpack.c.b16 %v2124, %v2123
    %v2161 = vpack.c.b16 %v2126, %v2125
    %v2162 = vpack.c.b16 %v2128, %v2127
    %v2163 = vpack.c.b16 %v2130, %v2129
    %v2164 = vpack.c.b16 %v2132, %v2131
    %2197 = vmatprep.subr.bf16.mxu0 0
    %2198 = vmatpush1.bf16.msra.mxu0 %v2140
    %2199 = vmatprep.subr.bf16.mxu0 0
    %2200 = vmatpush1.bf16.msra.mxu0 %v2139
    %2201 = vmatprep.subr.bf16.mxu0 0
    %2202 = vmatpush1.bf16.msra.mxu0 %v2138
    %2203 = vmatprep.subr.bf16.mxu0 0
    %2204 = vmatpush1.bf16.msra.mxu0 %v2137
    %2205 = vmatprep.subr.bf16.mxu0 0
    %2206 = vmatpush1.bf16.msra.mxu0 %v2136
    %2207 = vmatprep.subr.bf16.mxu0 0
    %2208 = vmatpush1.bf16.msra.mxu0 %v2135
    %2209 = vmatprep.subr.bf16.mxu0 0
    %2210 = vmatpush1.bf16.msra.mxu0 %v2134
    %2211 = vmatprep.subr.bf16.mxu0 0
    %2212 = vmatpush1.bf16.msra.mxu0 %v2133
    %2213 = vmatprep.subr.bf16.mxu0 0
    %2214 = vmatpush2.bf16.msra.mxu0 %v2148
    %2215 = vmatprep.subr.bf16.mxu0 0
    %2216 = vmatpush2.bf16.msra.mxu0 %v2147
    %2217 = vmatprep.subr.bf16.mxu0 0
    %2218 = vmatpush2.bf16.msra.mxu0 %v2146
    %2219 = vmatprep.subr.bf16.mxu0 0
    %2220 = vmatpush2.bf16.msra.mxu0 %v2145
    %2221 = vmatprep.subr.bf16.mxu0 0
    %2222 = vmatpush2.bf16.msra.mxu0 %v2144
    %2223 = vmatprep.subr.bf16.mxu0 0
    %2224 = vmatpush2.bf16.msra.mxu0 %v2143
    %2225 = vmatprep.subr.bf16.mxu0 0
    %2226 = vmatpush2.bf16.msra.mxu0 %v2142
    %2227 = vmatprep.subr.bf16.mxu0 0
    %2228 = vmatpush2.bf16.msra.mxu0 %v2141
    %2229 = vmatprep.mubr.bf16.mxu0 %v1998
    %2230 = vmatmul.mubr.bf16.gmra.mxu0 %v1997
    %v2231 = vpop.f32.mrf.mxu0
    %v2232 = vadd.f32 %v1971, %v2231
    %v2233 = vpop.f32.mrf.mxu0
    %v2234 = vpop.f32.mrf.mxu0
    %v2235 = vpop.f32.mrf.mxu0
    %2236 = vdwg.mxu0
    %2237 = vmatprep.subr.bf16.mxu0 0
    %2238 = vmatpush1.bf16.msra.mxu0 %v2156
    %2239 = vmatprep.subr.bf16.mxu0 0
    %2240 = vmatpush1.bf16.msra.mxu0 %v2155
    %2241 = vmatprep.subr.bf16.mxu0 0
    %2242 = vmatpush1.bf16.msra.mxu0 %v2154
    %2243 = vmatprep.subr.bf16.mxu0 0
    %2244 = vmatpush1.bf16.msra.mxu0 %v2153
    %2245 = vmatprep.subr.bf16.mxu0 0
    %2246 = vmatpush1.bf16.msra.mxu0 %v2152
    %2247 = vmatprep.subr.bf16.mxu0 0
    %2248 = vmatpush1.bf16.msra.mxu0 %v2151
    %2249 = vmatprep.subr.bf16.mxu0 0
    %2250 = vmatpush1.bf16.msra.mxu0 %v2150
    %2251 = vmatprep.subr.bf16.mxu0 0
    %2252 = vmatpush1.bf16.msra.mxu0 %v2149
    %2253 = vmatprep.subr.bf16.mxu0 0
    %2254 = vmatpush2.bf16.msra.mxu0 %v2164
    %2255 = vmatprep.subr.bf16.mxu0 0
    %2256 = vmatpush2.bf16.msra.mxu0 %v2163
    %2257 = vmatprep.subr.bf16.mxu0 0
    %2258 = vmatpush2.bf16.msra.mxu0 %v2162
    %2259 = vmatprep.subr.bf16.mxu0 0
    %2260 = vmatpush2.bf16.msra.mxu0 %v2161
    %2261 = vmatprep.subr.bf16.mxu0 0
    %2262 = vmatpush2.bf16.msra.mxu0 %v2160
    %2263 = vmatprep.subr.bf16.mxu0 0
    %2264 = vmatpush2.bf16.msra.mxu0 %v2159
    %2265 = vmatprep.subr.bf16.mxu0 0
    %2266 = vmatpush2.bf16.msra.mxu0 %v2158
    %2267 = vmatprep.subr.bf16.mxu0 0
    %2268 = vmatpush2.bf16.msra.mxu0 %v2157
    %2269 = vmatprep.mubr.bf16.mxu0 %v2000
    %2270 = vmatmul.mubr.bf16.gmra.mxu0 %v1999
    %v2271 = vpop.f32.mrf.mxu0
    %v2272 = vadd.f32 %v2232, %v2271
    %v2273 = vpop.f32.mrf.mxu0
    %v2274 = vpop.f32.mrf.mxu0
    %v2275 = vpop.f32.mrf.mxu0
    %2276 = vdwg.mxu0
    %v2277 = vld [vmem:[%s1] sm:$0x3]
    %v2278 = vmul.f32 %v2272, 0.5
    %v2279 = vmul.f32 %v2278, 1.442695
    %v2280 = vpow.pop %v2279
    %2282 = vrot.lane.b32.xlu0 %v2280, 125
    %v2283 = vpop.permute.xlu0 %2282
    %v2285 = vmul.f32 %v2277, %v2283
    %v2286 = vadd.f32 %v2285, %v2272
    %v2289 = vrot.slane %v1093, 7
    %v2290 = vsel %vm1989, %v2289, %v1092
    %2293 = vrot.lane.b32.xlu0 %v2286, 8
    %v2294 = vpop.permute.xlu0 %2293
    %v2296 = vsel %vm1014, %v2290, %v2294
    %v2297 = vld [vmem:[%s6] sm:$0xf]
    %v2298 = vld [vmem:[%s6 + $0x4] sm:$0x3]
    %v2299 = vpack.c.bf16 %v2296, %v2296
    %v2300 = vld [vmem:[%s9 + $0x5] ss:$0 sm:$0xff]
    %v2303 = vunpack.c.l.b16 %v2297
    %v2304 = vunpack.c.l.b16 %v2298
    %v2305 = vpack.c.b16 %v2304, %v2303
    %vm2306 = vcmask 89088
    %v2308 = vsel %vm2306, %v2299, 0
    %vm2310 = vcmask 1044480
    %vm2311 = vcmask 1045504
    %v2312 = vsel %vm2310, 4294967295, 65535
    %v2313 = vsel %vm2311, %v2312, 0
    %v2315 = vand.u32 %v2305, %v2313
    %2317 = vmatprep.subr.bf16.mxu0 0
    %2318 = vmatpush1.bf16.msra.mxu0 0
    %2319 = vmatprep.subr.bf16.mxu0 0
    %2320 = vmatpush1.bf16.msra.mxu0 0
    %2321 = vmatprep.subr.bf16.mxu0 0
    %2322 = vmatpush1.bf16.msra.mxu0 0
    %2323 = vmatprep.subr.bf16.mxu0 0
    %2324 = vmatpush1.bf16.msra.mxu0 0
    %2325 = vmatprep.subr.bf16.mxu0 0
    %2326 = vmatpush1.bf16.msra.mxu0 0
    %2327 = vmatprep.subr.bf16.mxu0 0
    %2328 = vmatpush1.bf16.msra.mxu0 0
    %2329 = vmatprep.subr.bf16.mxu0 0
    %2330 = vmatpush1.bf16.msra.mxu0 0
    %2331 = vmatprep.subr.bf16.mxu0 0
    %2332 = vmatpush1.bf16.msra.mxu0 %v2315
    %2333 = vmatprep.subr.bf16.mxu0 0
    %2334 = vmatpush2.bf16.msra.mxu0 0
    %2335 = vmatprep.subr.bf16.mxu0 0
    %2336 = vmatpush2.bf16.msra.mxu0 0
    %2337 = vmatprep.subr.bf16.mxu0 0
    %2338 = vmatpush2.bf16.msra.mxu0 0
    %2339 = vmatprep.subr.bf16.mxu0 0
    %2340 = vmatpush2.bf16.msra.mxu0 0
    %2341 = vmatprep.subr.bf16.mxu0 0
    %2342 = vmatpush2.bf16.msra.mxu0 0
    %2343 = vmatprep.subr.bf16.mxu0 0
    %2344 = vmatpush2.bf16.msra.mxu0 0
    %2345 = vmatprep.subr.bf16.mxu0 0
    %2346 = vmatpush2.bf16.msra.mxu0 0
    %2347 = vmatprep.subr.bf16.mxu0 0
    %2348 = vmatpush2.bf16.msra.mxu0 0
    %2349 = vmatprep.mubr.bf16.mxu0 0
    %2350 = vmatmul.mubr.bf16.gmra.mxu0 %v2308
    %v2351 = vpop.f32.mrf.mxu0
    %v2352 = vadd.f32 %v2300, %v2351
    %v2353 = vpop.f32.mrf.mxu0
    %v2354 = vpop.f32.mrf.mxu0
    %v2355 = vpop.f32.mrf.mxu0
    %2356 = vdwg.mxu0
    %v2357 = vmax.f32 %v2352, 0.0
    %v2358 = vld [vmem:[%s7] sm:$0xf]
    %v2359 = vld [vmem:[%s7 + $0x4] sm:$0xf]
    %v2360 = vld [vmem:[%s7 + $0x8] sm:$0xf]
    %v2361 = vld [vmem:[%s7 + $0xc] sm:$0xf]
    %v2362 = vld [vmem:[%s7 + $0x10] sm:$0xf]
    %v2363 = vld [vmem:[%s7 + $0x14] sm:$0xf]
    %v2364 = vld [vmem:[%s7 + $0x18] sm:$0xf]
    %v2365 = vld [vmem:[%s7 + $0x1c] sm:$0xf]
    %v2366 = vpack.c.bf16 %v2357, %v2357
    %v2367 = vld [vmem:[%s9 + $0x6] ss:$0 sm:$0xff]
    %v2376 = vunpack.c.l.b16 %v2358
    %v2377 = vunpack.c.l.b16 %v2359
    %v2378 = vunpack.c.l.b16 %v2360
    %v2379 = vunpack.c.l.b16 %v2361
    %v2380 = vunpack.c.l.b16 %v2362
    %v2381 = vunpack.c.l.b16 %v2363
    %v2382 = vunpack.c.l.b16 %v2364
    %v2383 = vunpack.c.l.b16 %v2365
    %v2384 = vpack.c.b16 %v2377, %v2376
    %v2385 = vpack.c.b16 %v2379, %v2378
    %v2386 = vpack.c.b16 %v2381, %v2380
    %v2387 = vpack.c.b16 %v2383, %v2382
    %vm2392 = vcmask 523264
    %v2394 = vsel %vm2392, %v2366, 0
    %2396 = vmatprep.subr.bf16.mxu0 0
    %2397 = vmatpush1.bf16.msra.mxu0 0
    %2398 = vmatprep.subr.bf16.mxu0 0
    %2399 = vmatpush1.bf16.msra.mxu0 0
    %2400 = vmatprep.subr.bf16.mxu0 0
    %2401 = vmatpush1.bf16.msra.mxu0 0
    %2402 = vmatprep.subr.bf16.mxu0 0
    %2403 = vmatpush1.bf16.msra.mxu0 0
    %2404 = vmatprep.subr.bf16.mxu0 0
    %2405 = vmatpush1.bf16.msra.mxu0 %v2387
    %2406 = vmatprep.subr.bf16.mxu0 0
    %2407 = vmatpush1.bf16.msra.mxu0 %v2386
    %2408 = vmatprep.subr.bf16.mxu0 0
    %2409 = vmatpush1.bf16.msra.mxu0 %v2385
    %2410 = vmatprep.subr.bf16.mxu0 0
    %2411 = vmatpush1.bf16.msra.mxu0 %v2384
    %2412 = vmatprep.subr.bf16.mxu0 0
    %2413 = vmatpush2.bf16.msra.mxu0 0
    %2414 = vmatprep.subr.bf16.mxu0 0
    %2415 = vmatpush2.bf16.msra.mxu0 0
    %2416 = vmatprep.subr.bf16.mxu0 0
    %2417 = vmatpush2.bf16.msra.mxu0 0
    %2418 = vmatprep.subr.bf16.mxu0 0
    %2419 = vmatpush2.bf16.msra.mxu0 0
    %2420 = vmatprep.subr.bf16.mxu0 0
    %2421 = vmatpush2.bf16.msra.mxu0 0
    %2422 = vmatprep.subr.bf16.mxu0 0
    %2423 = vmatpush2.bf16.msra.mxu0 0
    %2424 = vmatprep.subr.bf16.mxu0 0
    %2425 = vmatpush2.bf16.msra.mxu0 0
    %2426 = vmatprep.subr.bf16.mxu0 0
    %2427 = vmatpush2.bf16.msra.mxu0 0
    %2428 = vmatprep.mubr.bf16.mxu0 0
    %2429 = vmatmul.mubr.bf16.gmra.mxu0 %v2394
    %v2430 = vpop.f32.mrf.mxu0
    %v2431 = vadd.f32 %v2367, %v2430
    %v2432 = vpop.f32.mrf.mxu0
    %v2433 = vpop.f32.mrf.mxu0
    %v2434 = vpop.f32.mrf.mxu0
    %2435 = vdwg.mxu0
    %v2436 = vmax.f32 %v2431, 0.0
    %s2437 = smul.u32 4, 8
    %s2438 = smul.u32 %s2437, 2
    %s2439 = sshll.u32 %s2438, 4
    %2440 = dma.done %s144, %s2439
    %v2441 = vld [vmem:[#allocation3] sm:$0xff]
    %v2442 = vld [vmem:[#allocation3 + $0x8] sm:$0xff]
    %v2443 = vld [vmem:[#allocation3 + $0x10] sm:$0xff]
    %v2444 = vld [vmem:[#allocation3 + $0x18] sm:$0xff]
    %v2445 = vld [vmem:[#allocation3 + $0x20] sm:$0xff]
    %v2446 = vld [vmem:[#allocation3 + $0x28] sm:$0xff]
    %v2447 = vld [vmem:[#allocation3 + $0x30] sm:$0xff]
    %v2448 = vld [vmem:[#allocation3 + $0x38] sm:$0xff]
    %v2449 = vpack.c.bf16 %v2436, %v2436
    %s2450 = scalar_lea.vmem %s9, 7
    %v2451 = vld [vmem:[%s2450] ss:$8 sm:$0x3]
    %v2453 = vlaneseq
    %v2454 = vshrl.u32 %v2453, 7
    %v2455 = vsub.s32 0, %v2454
    %v2456 = vrot.slane %v2451, %v2455
    %v2457 = vlaneseq
    %v2458 = vshrl.u32 %v2457, 7
    %v2459 = vsub.s32 1, %v2458
    %v2460 = vrot.slane %v2451, %v2459
    %v2471 = vunpack.c.l.b16 %v2441
    %v2472 = vunpack.c.h.b16 %v2441
    %v2473 = vunpack.c.l.b16 %v2442
    %v2474 = vunpack.c.h.b16 %v2442
    %v2475 = vunpack.c.l.b16 %v2443
    %v2476 = vunpack.c.h.b16 %v2443
    %v2477 = vunpack.c.l.b16 %v2444
    %v2478 = vunpack.c.h.b16 %v2444
    %v2479 = vunpack.c.l.b16 %v2445
    %v2480 = vunpack.c.h.b16 %v2445
    %v2481 = vunpack.c.l.b16 %v2446
    %v2482 = vunpack.c.h.b16 %v2446
    %v2483 = vunpack.c.l.b16 %v2447
    %v2484 = vunpack.c.h.b16 %v2447
    %v2485 = vunpack.c.l.b16 %v2448
    %v2486 = vunpack.c.h.b16 %v2448
    %v2487 = vpack.c.b16 %v2473, %v2471
    %v2488 = vpack.c.b16 %v2474, %v2472
    %v2489 = vpack.c.b16 %v2477, %v2475
    %v2490 = vpack.c.b16 %v2478, %v2476
    %v2491 = vpack.c.b16 %v2481, %v2479
    %v2492 = vpack.c.b16 %v2482, %v2480
    %v2493 = vpack.c.b16 %v2485, %v2483
    %v2494 = vpack.c.b16 %v2486, %v2484
    %v2504 = vsel %vm2392, %v2449, 0
    %2506 = vmatprep.subr.bf16.mxu0 0
    %2507 = vmatpush1.bf16.msra.mxu0 0
    %2508 = vmatprep.subr.bf16.mxu0 0
    %2509 = vmatpush1.bf16.msra.mxu0 0
    %2510 = vmatprep.subr.bf16.mxu0 0
    %2511 = vmatpush1.bf16.msra.mxu0 0
    %2512 = vmatprep.subr.bf16.mxu0 0
    %2513 = vmatpush1.bf16.msra.mxu0 0
    %2514 = vmatprep.subr.bf16.mxu0 %v2494
    %2515 = vmatpush1.bf16.msra.mxu0 %v2493
    %2516 = vmatprep.subr.bf16.mxu0 %v2492
    %2517 = vmatpush1.bf16.msra.mxu0 %v2491
    %2518 = vmatprep.subr.bf16.mxu0 %v2490
    %2519 = vmatpush1.bf16.msra.mxu0 %v2489
    %2520 = vmatprep.subr.bf16.mxu0 %v2488
    %2521 = vmatpush1.bf16.msra.mxu0 %v2487
    %2522 = vmatprep.subr.bf16.mxu0 0
    %2523 = vmatpush2.bf16.msra.mxu0 0
    %2524 = vmatprep.subr.bf16.mxu0 0
    %2525 = vmatpush2.bf16.msra.mxu0 0
    %2526 = vmatprep.subr.bf16.mxu0 0
    %2527 = vmatpush2.bf16.msra.mxu0 0
    %2528 = vmatprep.subr.bf16.mxu0 0
    %2529 = vmatpush2.bf16.msra.mxu0 0
    %2530 = vmatprep.subr.bf16.mxu0 0
    %2531 = vmatpush2.bf16.msra.mxu0 0
    %2532 = vmatprep.subr.bf16.mxu0 0
    %2533 = vmatpush2.bf16.msra.mxu0 0
    %2534 = vmatprep.subr.bf16.mxu0 0
    %2535 = vmatpush2.bf16.msra.mxu0 0
    %2536 = vmatprep.subr.bf16.mxu0 0
    %2537 = vmatpush2.bf16.msra.mxu0 0
    %2538 = vmatprep.mubr.bf16.mxu0 0
    %2539 = vmatmul.mubr.bf16.gmra.mxu0 %v2504
    %v2540 = vpop.f32.mrf.mxu0
    %v2541 = vadd.f32 %v2456, %v2540
    %v2542 = vpop.f32.mrf.mxu0
    %v2543 = vadd.f32 %v2460, %v2542
    %v2544 = vpop.f32.mrf.mxu0
    %v2545 = vpop.f32.mrf.mxu0
    %2546 = vdwg.mxu0
    %v2547 = vmax.f32 %v2541, 0.0
    %v2548 = vmax.f32 %v2543, 0.0
    %v2549 = vld [vmem:[%s8] sm:$0xf]
    %v2550 = vld [vmem:[%s8 + $0x4] sm:$0xf]
    %v2551 = vld [vmem:[%s8 + $0x8] sm:$0xf]
    %v2552 = vld [vmem:[%s8 + $0xc] sm:$0xf]
    %v2553 = vld [vmem:[%s8 + $0x10] sm:$0xf]
    %v2554 = vld [vmem:[%s8 + $0x14] sm:$0xf]
    %v2555 = vld [vmem:[%s8 + $0x18] sm:$0xf]
    %v2556 = vld [vmem:[%s8 + $0x1c] sm:$0xf]
    %v2557 = vld [vmem:[%s8 + $0x20] sm:$0xf]
    %v2558 = vld [vmem:[%s8 + $0x24] sm:$0xf]
    %v2559 = vld [vmem:[%s8 + $0x28] sm:$0xf]
    %v2560 = vld [vmem:[%s8 + $0x2c] sm:$0xf]
    %v2561 = vld [vmem:[%s8 + $0x30] sm:$0xf]
    %v2562 = vld [vmem:[%s8 + $0x34] sm:$0xf]
    %v2563 = vld [vmem:[%s8 + $0x38] sm:$0xf]
    %v2564 = vld [vmem:[%s8 + $0x3c] sm:$0xf]
    %v2565 = vld [vmem:[%s8 + $0x40] sm:$0xf]
    %v2566 = vld [vmem:[%s8 + $0x44] sm:$0xf]
    %v2567 = vld [vmem:[%s8 + $0x48] sm:$0xf]
    %v2568 = vld [vmem:[%s8 + $0x4c] sm:$0xf]
    %v2569 = vld [vmem:[%s8 + $0x50] sm:$0xf]
    %v2570 = vld [vmem:[%s8 + $0x54] sm:$0xf]
    %v2571 = vld [vmem:[%s8 + $0x58] sm:$0xf]
    %v2572 = vld [vmem:[%s8 + $0x5c] sm:$0xf]
    %v2573 = vld [vmem:[%s8 + $0x60] sm:$0xf]
    %v2574 = vld [vmem:[%s8 + $0x64] sm:$0xf]
    %v2575 = vld [vmem:[%s8 + $0x68] sm:$0xf]
    %v2576 = vld [vmem:[%s8 + $0x6c] sm:$0xf]
    %v2577 = vld [vmem:[%s8 + $0x70] sm:$0xf]
    %v2578 = vld [vmem:[%s8 + $0x74] sm:$0xf]
    %v2579 = vld [vmem:[%s8 + $0x78] sm:$0xf]
    %v2580 = vld [vmem:[%s8 + $0x7c] sm:$0xf]
    %v2581 = vpack.c.bf16 %v2547, %v2547
    %v2582 = vpack.c.bf16 %v2548, %v2548
    %v2615 = vunpack.c.l.b16 %v2549
    %v2616 = vunpack.c.l.b16 %v2550
    %v2617 = vunpack.c.l.b16 %v2551
    %v2618 = vunpack.c.l.b16 %v2552
    %v2619 = vunpack.c.l.b16 %v2553
    %v2620 = vunpack.c.l.b16 %v2554
    %v2621 = vunpack.c.l.b16 %v2555
    %v2622 = vunpack.c.l.b16 %v2556
    %v2623 = vunpack.c.l.b16 %v2557
    %v2624 = vunpack.c.l.b16 %v2558
    %v2625 = vunpack.c.l.b16 %v2559
    %v2626 = vunpack.c.l.b16 %v2560
    %v2627 = vunpack.c.l.b16 %v2561
    %v2628 = vunpack.c.l.b16 %v2562
    %v2629 = vunpack.c.l.b16 %v2563
    %v2630 = vunpack.c.l.b16 %v2564
    %v2631 = vunpack.c.l.b16 %v2565
    %v2632 = vunpack.c.l.b16 %v2566
    %v2633 = vunpack.c.l.b16 %v2567
    %v2634 = vunpack.c.l.b16 %v2568
    %v2635 = vunpack.c.l.b16 %v2569
    %v2636 = vunpack.c.l.b16 %v2570
    %v2637 = vunpack.c.l.b16 %v2571
    %v2638 = vunpack.c.l.b16 %v2572
    %v2639 = vunpack.c.l.b16 %v2573
    %v2640 = vunpack.c.l.b16 %v2574
    %v2641 = vunpack.c.l.b16 %v2575
    %v2642 = vunpack.c.l.b16 %v2576
    %v2643 = vunpack.c.l.b16 %v2577
    %v2644 = vunpack.c.l.b16 %v2578
    %v2645 = vunpack.c.l.b16 %v2579
    %v2646 = vunpack.c.l.b16 %v2580
    %v2647 = vpack.c.b16 %v2616, %v2615
    %v2648 = vpack.c.b16 %v2618, %v2617
    %v2649 = vpack.c.b16 %v2620, %v2619
    %v2650 = vpack.c.b16 %v2622, %v2621
    %v2651 = vpack.c.b16 %v2624, %v2623
    %v2652 = vpack.c.b16 %v2626, %v2625
    %v2653 = vpack.c.b16 %v2628, %v2627
    %v2654 = vpack.c.b16 %v2630, %v2629
    %v2655 = vpack.c.b16 %v2632, %v2631
    %v2656 = vpack.c.b16 %v2634, %v2633
    %v2657 = vpack.c.b16 %v2636, %v2635
    %v2658 = vpack.c.b16 %v2638, %v2637
    %v2659 = vpack.c.b16 %v2640, %v2639
    %v2660 = vpack.c.b16 %v2642, %v2641
    %v2661 = vpack.c.b16 %v2644, %v2643
    %v2662 = vpack.c.b16 %v2646, %v2645
    %2679 = vmatprep.subr.bf16.mxu0 0
    %2680 = vmatpush1.bf16.msra.mxu0 %v2654
    %2681 = vmatprep.subr.bf16.mxu0 0
    %2682 = vmatpush1.bf16.msra.mxu0 %v2653
    %2683 = vmatprep.subr.bf16.mxu0 0
    %2684 = vmatpush1.bf16.msra.mxu0 %v2652
    %2685 = vmatprep.subr.bf16.mxu0 0
    %2686 = vmatpush1.bf16.msra.mxu0 %v2651
    %2687 = vmatprep.subr.bf16.mxu0 0
    %2688 = vmatpush1.bf16.msra.mxu0 %v2650
    %2689 = vmatprep.subr.bf16.mxu0 0
    %2690 = vmatpush1.bf16.msra.mxu0 %v2649
    %2691 = vmatprep.subr.bf16.mxu0 0
    %2692 = vmatpush1.bf16.msra.mxu0 %v2648
    %2693 = vmatprep.subr.bf16.mxu0 0
    %2694 = vmatpush1.bf16.msra.mxu0 %v2647
    %2695 = vmatprep.subr.bf16.mxu0 0
    %2696 = vmatpush2.bf16.msra.mxu0 %v2662
    %2697 = vmatprep.subr.bf16.mxu0 0
    %2698 = vmatpush2.bf16.msra.mxu0 %v2661
    %2699 = vmatprep.subr.bf16.mxu0 0
    %2700 = vmatpush2.bf16.msra.mxu0 %v2660
    %2701 = vmatprep.subr.bf16.mxu0 0
    %2702 = vmatpush2.bf16.msra.mxu0 %v2659
    %2703 = vmatprep.subr.bf16.mxu0 0
    %2704 = vmatpush2.bf16.msra.mxu0 %v2658
    %2705 = vmatprep.subr.bf16.mxu0 0
    %2706 = vmatpush2.bf16.msra.mxu0 %v2657
    %2707 = vmatprep.subr.bf16.mxu0 0
    %2708 = vmatpush2.bf16.msra.mxu0 %v2656
    %2709 = vmatprep.subr.bf16.mxu0 0
    %2710 = vmatpush2.bf16.msra.mxu0 %v2655
    %2711 = vmatprep.mubr.bf16.mxu0 %v2582
    %2712 = vmatmul.mubr.bf16.gmra.mxu0 %v2581
    %v2713 = vpop.f32.mrf.mxu0
    %v2714 = vadd.f32 0.0, %v2713
    %v2715 = vpop.f32.mrf.mxu0
    %v2716 = vpop.f32.mrf.mxu0
    %v2717 = vpop.f32.mrf.mxu0
    %2718 = vdwg.mxu0
    %v2719 = vlaneseq
    %v2720 = vand.u32 %v2719, 127
    %vm2721 = vcmask 66616
    %v2722 = vsel %vm2721, %v2714, -inf
    %2723 = vmax.xlane.f32.xlu0 %v2722
    %v2724 = vpop.xlane.xlu0 %2723
    %vm2725 = vcmp.ge.f32.partialorder %v2714, %v2724
    %2726 = vrot.lane.b32.xlu0 %v2720, 7
    %v2727 = vpop.permute.xlu0 %2726
    %v2728 = vsel %vm2725, %v2727, 2
    %v2729 = vsel %vm2721, %v2728, 2147483647
    %v2730 = vand.u32 %v2729, 65535
    %v2731 = vshra.s32 %v2729, 16
    %v2732 = vcvt.s32.f32 %v2730
    %v2733 = vcvt.s32.f32 %v2731
    %2734 = vmin.xlane.f32.xlu0 %v2733
    %v2735 = vpop.xlane.xlu0 %2734
    %vm2736 = vcmp.eq.f32.partialorder %v2733, %v2735
    %v2737 = vsel %vm2736, %v2732, inf
    %2738 = vmin.xlane.f32.xlu0 %v2737
    %v2739 = vpop.xlane.xlu0 %2738
    %v2740 = vcvt.f32.s32 %v2739
    %v2741 = vcvt.f32.s32 %v2735
    %v2742 = vshll.u32 %v2741, 16
    %v2743 = vadd.s32 %v2742, %v2740
    %v2744 = vcvt.s32.f32 %v2743
    %v2745 = vsub.f32 %v2714, 0.78539
    %v2746 = vrcp.pop 3.1415927
    %v2747 = vmul.f32 %v2745, %v2746
    %v2748 = vadd.f32 %v2747, 0.0
    %v2749 = vfloor.f32 %v2748
    %v2750 = vmul.f32 %v2749, 3.1415927
    %v2751 = vsub.f32 %v2745, %v2750
    %v2752 = vadd.f32 %v2751, 0.78539
    %v2753 = vmul.f32 %v2744, 3.1415927
    %v2754 = vadd.f32 %v2752, %v2753
    %vm2755 = vcmp.eq.s32.totalorder %v2720, 6
    %2757 = vset.pattern.permute.xlu0 6
    %2758 = vperm.xlu0 %2757, %v2754
    %v2759 = vpop.permute.xlu0 %2758
    %v2761 = vsel %vm2755, %v2759, %v2714
    %vm2762 = vcmask 123904
    %2763 = vst.msk [vmem:[#allocation5] sm:$0x3] %vm2762, %v2761
    // Predicated region
    $region110: #{_lambda_.1} parent=1 // pred_check
      _
    $region111: #{_lambda_.1} parent=1 // pred_check_branch
      %2765 = sbr.rel (0) target = $region113
    $region112: #{_lambda_.1} parent=1 // pred_region
      %s2767 = ssub.s32 32, 32
      %2768 = vsyncadd [#allocation6], %s2767
      %s2770 = sshll.u32 [#allocation5], 4
      %s2771 = int_to_ptr.vmem [resolvable:$true] %s2770
      %2773 = dma.vmem_to_hbm [thread:$0]  %s2771, 32, %s12, [#allocation6]
    $region113: #{_lambda_.1} parent=1 // pred_fallthru
      _
    // Predicated region
    $region114: #{_lambda_.1} parent=1 // pred_check
      _
    $region115: #{_lambda_.1} parent=1 // pred_check_branch
      %2775 = sbr.rel (0) target = $region117
    $region116: #{_lambda_.1} parent=1 // pred_region
      %2776 = dma.done [#allocation6], 32
    $region117: #{_lambda_.1} parent=1 // pred_fallthru
      _
    %2777 = vsyncpa [#allocation6], 1
  %2778 = vsyncmov [#allocation4]
  %s2779 = vpop.sfrf %2778
  %p2780 = scmp.eq.s32.totalorder %s2779, 0
  %p2781 = pneg %p2780
  %2783 = shalt.err (%p2781)
  %s2784 = scalar_lea.sflag [#allocation4], 1
  %2785 = vsyncmov %s2784
  %s2786 = vpop.sfrf %2785
  %p2787 = scmp.eq.s32.totalorder %s2786, 0
  %p2788 = pneg %p2787
  %2790 = shalt.err (%p2788)

</llo_original>
